<compile_context>
chip_gen: v6e
topology: v6e:2x2x1
jax: 0.10.0
libtpu: 0.0.40
codegen_flags: <defaults>
</compile_context>

<pallas_src>
import math

import jax
import jax.numpy as jnp
from jax.experimental import pallas as pl
from jax.experimental.pallas import tpu as pltpu


def _cca_kernel(q_ref, kv_ref, wq_ref, bq_ref, wk_ref, bk_ref, wv_ref, bv_ref, o_ref):
    """One (chunk-block, head) tile of chunked cross attention.

    q_ref  : [KB, C, H]       bf16   KB chunks of chunk_len queries
    kv_ref : [KB, L, Dkv]     bf16   L = n_neighbors * neighbor_len
    wq_ref : [1, H,   d]      bf16   this head's q projection (1/sqrt(d) folded in)
    wk_ref : [1, Dkv, d]      bf16
    wv_ref : [1, Dkv, d]      bf16
    b*_ref : [1, 1,   d]      f32
    o_ref  : [1, KB, C, d]    f32
    """
    KB, C, H = q_ref.shape
    _, L, Dkv = kv_ref.shape
    d = wq_ref.shape[-1]

    # Flatten chunk-block into the M dim so each projection is one big-M MXU matmul
    # (leading-dim merge only; lane dim untouched -> no relayout).
    q2 = q_ref[...].reshape(KB * C, H)
    kv2 = kv_ref[...].reshape(KB * L, Dkv)

    qh = jnp.dot(q2, wq_ref[0], preferred_element_type=jnp.float32) + bq_ref[0]
    kh = jnp.dot(kv2, wk_ref[0], preferred_element_type=jnp.float32) + bk_ref[0]
    vh = jnp.dot(kv2, wv_ref[0], preferred_element_type=jnp.float32) + bv_ref[0]

    qh = qh.reshape(KB, C, d).astype(jnp.bfloat16)
    kh = kh.reshape(KB, L, d).astype(jnp.bfloat16)
    vh = vh.reshape(KB, L, d).astype(jnp.bfloat16)

    # Scores for all KB chunks at once (chunk = batch dim of the contraction).
    s = jnp.einsum('kcd,kld->kcl', qh, kh, preferred_element_type=jnp.float32)

    # Softmax over the flattened (n_neighbors * neighbor_len) axis, in f32.
    m = jnp.max(s, axis=-1, keepdims=True)
    p = jnp.exp(s - m)
    denom = jnp.sum(p, axis=-1, keepdims=True)
    p = (p * pl.reciprocal(denom, approx=True)).astype(jnp.bfloat16)

    o = jnp.einsum('kcl,kld->kcd', p, vh, preferred_element_type=jnp.float32)
    o_ref[0] = o.astype(o_ref.dtype)


def _auto_chunk_block(BC, C, H, L, Dkv, d, vmem_budget_bytes=12 << 20):
    """Pick how many chunks to batch per grid step.

    Target: M = KB*C around 512 rows for the projection matmuls, bounded so that the
    double-buffered bf16 activation blocks plus the f32 per-head output block stay
    within a conservative VMEM budget (safe on v5e/v6e/v7x defaults).
    """
    bytes_per_chunk = 2 * 2 * (C * H + L * Dkv) + 2 * 4 * (C * d)
    kb_vmem = max(1, vmem_budget_bytes // bytes_per_chunk)
    kb_m = max(1, 512 // max(C, 1))
    return int(max(1, min(BC, kb_vmem, kb_m)))


def chunked_cross_attention(query, kv, params, *, chunk_len, num_heads,
                            chunk_block=None):
    """Mirrors ChunkedCrossAttention.forward (out_proj is defined but unused there)."""
    B, S, H = query.shape
    _, n_chunks, n_neighbors, neighbor_len, kv_dim = kv.shape
    assert H % num_heads == 0
    d = H // num_heads
    if n_chunks == 0:
        return query
    C = chunk_len
    L = n_neighbors * neighbor_len

    # --- glue: causal shift + right-pad + chunking (plain JAX) ---
    q = query[:, C - 1:]
    q_len = q.shape[1]
    if q_len > n_chunks * C:
        raise RuntimeError("q.shape[1] must be <= n_chunks * chunk_len")
    q = jnp.pad(q, ((0, 0), (0, n_chunks * C - q_len), (0, 0)))
    q = q.reshape(B * n_chunks, C, H)
    kv_flat = kv.reshape(B * n_chunks, L, kv_dim)

    # --- chunk-block batching: KB chunks per grid step ---
    BC = B * n_chunks
    KB = chunk_block if chunk_block is not None else _auto_chunk_block(
        BC, C, H, L, kv_dim, d)
    KB = max(1, min(KB, BC))
    nblk = pl.cdiv(BC, KB)
    BCp = nblk * KB
    if BCp != BC:                      # pad with dummy chunks; trimmed after the call
        q = jnp.pad(q, ((0, BCp - BC), (0, 0), (0, 0)))
        kv_flat = jnp.pad(kv_flat, ((0, BCp - BC), (0, 0), (0, 0)))

    # --- host-side weight prep: head-major [nh, in, d], bf16, q-scale folded in ---
    # PyTorch Linear stores W as [out, in]; head h uses rows h*d:(h+1)*d.
    scale = 1.0 / math.sqrt(d)

    def head_major(w):                 # [H, in] -> [nh, in, d]
        return jnp.transpose(w.reshape(num_heads, d, w.shape[1]), (0, 2, 1))

    wq = (head_major(params['wq']) * scale).astype(jnp.bfloat16)
    wk = head_major(params['wk']).astype(jnp.bfloat16)
    wv = head_major(params['wv']).astype(jnp.bfloat16)
    bq = (params['bq'].reshape(num_heads, 1, d) * scale).astype(jnp.float32)
    bk = params['bk'].reshape(num_heads, 1, d).astype(jnp.float32)
    bv = params['bv'].reshape(num_heads, 1, d).astype(jnp.float32)

    q_bf = q.astype(jnp.bfloat16)
    kv_bf = kv_flat.astype(jnp.bfloat16)

    out = pl.pallas_call(
        _cca_kernel,
        out_shape=jax.ShapeDtypeStruct((num_heads, BCp, C, d), jnp.float32),
        grid_spec=pltpu.PrefetchScalarGridSpec(
            num_scalar_prefetch=0,
            # heads innermost: q/kv blocks keep the same block index across the head
            # axis and stay VMEM-resident (no re-DMA of activations per head).
            grid=(nblk, num_heads),
            in_specs=[
                pl.BlockSpec((KB, C, H), lambda i, h: (i, 0, 0)),
                pl.BlockSpec((KB, L, kv_dim), lambda i, h: (i, 0, 0)),
                pl.BlockSpec((1, H, d), lambda i, h: (h, 0, 0)),       # Wq head slice
                pl.BlockSpec((1, 1, d), lambda i, h: (h, 0, 0)),       # bq
                pl.BlockSpec((1, kv_dim, d), lambda i, h: (h, 0, 0)),  # Wk
                pl.BlockSpec((1, 1, d), lambda i, h: (h, 0, 0)),       # bk
                pl.BlockSpec((1, kv_dim, d), lambda i, h: (h, 0, 0)),  # Wv
                pl.BlockSpec((1, 1, d), lambda i, h: (h, 0, 0)),       # bv
            ],
            out_specs=pl.BlockSpec((1, KB, C, d), lambda i, h: (h, i, 0, 0)),
        ),
        compiler_params=pltpu.CompilerParams(
            dimension_semantics=("parallel", "parallel"),
            vmem_limit_bytes=64 * 1024 * 1024),
    )(q_bf, kv_bf, wq, bq, wk, bk, wv, bv)

    # --- glue: reassemble heads -> hidden, un-chunk, causal zero-prefix, trim ---
    out = out[:, :BC]                                          # drop dummy chunk pad
    out = jnp.transpose(out, (1, 2, 0, 3)).reshape(B, n_chunks * C, H)
    out = jnp.concatenate([jnp.zeros((B, C - 1, H), out.dtype), out], axis=1)
    return out[:, :S]


def reference_cca(query, kv, params, *, chunk_len, num_heads):
    """Pure-JAX f32 reference mirroring the PyTorch forward.

    # TODO(synk): the original calls F.softmax without `dim`, whose legacy implicit-dim
    # rule would pick dim=1 (the n_chunks axis) — almost certainly a bug.  Both this
    # reference and the kernel implement the intended softmax over the flattened
    # (n_neighbors, neighbor_len) axis, matching the cited labml RETRO implementation.
    """
    B, S, H = query.shape
    _, n_chunks, n_neighbors, neighbor_len, kv_dim = kv.shape
    head_size = H // num_heads
    q = query[:, chunk_len - 1:]
    pad = n_chunks * chunk_len - q.shape[1]
    q = jnp.pad(q, ((0, 0), (0, pad), (0, 0))).reshape(B, n_chunks, chunk_len, H)
    qp = (q @ params["wq"].T + params["bq"]).reshape(
        B, n_chunks, chunk_len, num_heads, head_size)
    k = (kv @ params["wk"].T + params["bk"]).reshape(
        B, n_chunks, n_neighbors, neighbor_len, num_heads, head_size)
    v = (kv @ params["wv"].T + params["bv"]).reshape(
        B, n_chunks, n_neighbors, neighbor_len, num_heads, head_size)
    attn = jnp.einsum('bcihd,bcnjhd->bchinj', qp, k) / math.sqrt(head_size)
    shape = attn.shape
    attn = jax.nn.softmax(attn.reshape(*shape[:-2], -1), axis=-1).reshape(shape)
    h = jnp.einsum('bchinj,bcnjhd->bcihd', attn, v).reshape(B, n_chunks * chunk_len, H)
    h = jnp.concatenate([jnp.zeros((B, chunk_len - 1, H), h.dtype), h], axis=1)
    return h[:, :S]


def init_params(key, hidden, kv_dim):
    """Deterministic nn.Linear-style init (uniform +/- 1/sqrt(fan_in))."""
    def linear(k, out_dim, in_dim):
        k1, k2 = jax.random.split(k)
        bound = 1.0 / math.sqrt(in_dim)
        w = jax.random.uniform(k1, (out_dim, in_dim), jnp.float32, -bound, bound)
        b = jax.random.uniform(k2, (out_dim,), jnp.float32, -bound, bound)
        return w, b

    kq, kk, kv_, ko = jax.random.split(key, 4)
    wq, bq = linear(kq, hidden, hidden)
    wk, bk = linear(kk, hidden, kv_dim)
    wv, bv = linear(kv_, hidden, kv_dim)
    wo, bo = linear(ko, hidden, hidden)  # out_proj exists in __init__ but forward never uses it
    return dict(wq=wq, bq=bq, wk=wk, bk=bk, wv=wv, bv=bv, wo=wo, bo=bo)


if __name__ == "__main__":
    # Small, module-consistent, TPU-friendly shapes (H and kv_dim lane-aligned,
    # chunk_len / L multiples of 8 so in-kernel reshapes are tile-contiguous).
    B, S, H = 2, 32, 128
    num_heads, chunk_len = 4, 8
    n_chunks, n_neighbors, neighbor_len, kv_dim = 4, 2, 8, 64

    root = jax.random.PRNGKey(0)
    k_params, k_q, k_kv = jax.random.split(root, 3)
    params = init_params(k_params, H, kv_dim)
    query = jax.random.normal(k_q, (B, S, H), jnp.float32)
    kv = jax.random.normal(k_kv, (B, n_chunks, n_neighbors, neighbor_len, kv_dim),
                           jnp.float32)

    out = chunked_cross_attention(query, kv, params, chunk_len=chunk_len,
                                  num_heads=num_heads)
    out = jax.block_until_ready(out)

    ref = reference_cca(query, kv, params, chunk_len=chunk_len, num_heads=num_heads)
    assert out.shape == (B, S, H), out.shape
    # bf16 activations/weights with f32 accumulation vs. pure-f32 reference.
    max_err = float(jnp.max(jnp.abs(out - ref)))
    assert jnp.allclose(out, ref, atol=5e-2, rtol=5e-2), max_err
    print("KERNEL_OK")
</pallas_src>

<mosaic_0001>
module attributes {stable_mosaic.version = 11 : i64} {
  func.func @_cca_kernel(%arg0: i32, %arg1: i32, %arg2: memref<8x8x128xbf16, #tpu.memory_space<vmem>>, %arg3: memref<8x16x64xbf16, #tpu.memory_space<vmem>>, %arg4: memref<1x128x32xbf16, #tpu.memory_space<vmem>>, %arg5: memref<1x1x32xf32, #tpu.memory_space<vmem>>, %arg6: memref<1x64x32xbf16, #tpu.memory_space<vmem>>, %arg7: memref<1x1x32xf32, #tpu.memory_space<vmem>>, %arg8: memref<1x64x32xbf16, #tpu.memory_space<vmem>>, %arg9: memref<1x1x32xf32, #tpu.memory_space<vmem>>, %arg10: memref<1x8x8x32xf32, #tpu.memory_space<vmem>>) attributes {dimension_semantics = [#tpu.dimension_semantics<parallel>, #tpu.dimension_semantics<parallel>], iteration_bounds = array<i64: 1, 4>, scalar_prefetch = 0 : i64, scratch_operands = 0 : i64, tpu.core_type = #tpu.core_type<tc>, window_params = [{transform_indices = @transform_0, window_bounds = array<i64: 8, 8, 128>}, {transform_indices = @transform_1, window_bounds = array<i64: 8, 16, 64>}, {transform_indices = @transform_2, window_bounds = array<i64: 1, 128, 32>}, {transform_indices = @transform_3, window_bounds = array<i64: 1, 1, 32>}, {transform_indices = @transform_4, window_bounds = array<i64: 1, 64, 32>}, {transform_indices = @transform_5, window_bounds = array<i64: 1, 1, 32>}, {transform_indices = @transform_6, window_bounds = array<i64: 1, 64, 32>}, {transform_indices = @transform_7, window_bounds = array<i64: 1, 1, 32>}, {transform_indices = @transform_8, window_bounds = array<i64: 1, 8, 8, 32>}]} {
    %c0 = arith.constant 0 : index
    %c0_0 = arith.constant 0 : index
    %c0_1 = arith.constant 0 : index
    %0 = vector.load %arg2[%c0, %c0_0, %c0_1] : memref<8x8x128xbf16, #tpu.memory_space<vmem>>, vector<8x8x128xbf16>
    %1 = vector.shape_cast %0 : vector<8x8x128xbf16> to vector<64x128xbf16>
    %c0_2 = arith.constant 0 : index
    %c0_3 = arith.constant 0 : index
    %c0_4 = arith.constant 0 : index
    %2 = vector.load %arg3[%c0_2, %c0_3, %c0_4] : memref<8x16x64xbf16, #tpu.memory_space<vmem>>, vector<8x16x64xbf16>
    %3 = vector.shape_cast %2 : vector<8x16x64xbf16> to vector<128x64xbf16>
    %c0_5 = arith.constant 0 : index
    %c0_6 = arith.constant 0 : index
    %c0_7 = arith.constant 0 : index
    %4 = vector.load %arg4[%c0_5, %c0_6, %c0_7] : memref<1x128x32xbf16, #tpu.memory_space<vmem>>, vector<1x128x32xbf16>
    %5 = vector.shape_cast %4 : vector<1x128x32xbf16> to vector<128x32xbf16>
    %cst = arith.constant dense<0.000000e+00> : vector<64x32xf32>
    %6 = tpu.matmul %1, %5, %cst {dimension_numbers = #tpu.dot_dimension_numbers<[1], [0], [0], [1], [0, 0, 1, 1], [], []>} : vector<64x128xbf16>, vector<128x32xbf16>, vector<64x32xf32> -> vector<64x32xf32>
    %c0_8 = arith.constant 0 : index
    %c0_9 = arith.constant 0 : index
    %c0_10 = arith.constant 0 : index
    %7 = vector.load %arg5[%c0_8, %c0_9, %c0_10] : memref<1x1x32xf32, #tpu.memory_space<vmem>>, vector<1x1x32xf32>
    %8 = vector.shape_cast %7 : vector<1x1x32xf32> to vector<1x32xf32>
    %9 = vector.broadcast %8 : vector<1x32xf32> to vector<64x32xf32>
    %10 = arith.addf %6, %9 : vector<64x32xf32>
    %c0_11 = arith.constant 0 : index
    %c0_12 = arith.constant 0 : index
    %c0_13 = arith.constant 0 : index
    %11 = vector.load %arg6[%c0_11, %c0_12, %c0_13] : memref<1x64x32xbf16, #tpu.memory_space<vmem>>, vector<1x64x32xbf16>
    %12 = vector.shape_cast %11 : vector<1x64x32xbf16> to vector<64x32xbf16>
    %cst_14 = arith.constant dense<0.000000e+00> : vector<128x32xf32>
    %13 = tpu.matmul %3, %12, %cst_14 {dimension_numbers = #tpu.dot_dimension_numbers<[1], [0], [0], [1], [0, 0, 1, 1], [], []>} : vector<128x64xbf16>, vector<64x32xbf16>, vector<128x32xf32> -> vector<128x32xf32>
    %c0_15 = arith.constant 0 : index
    %c0_16 = arith.constant 0 : index
    %c0_17 = arith.constant 0 : index
    %14 = vector.load %arg7[%c0_15, %c0_16, %c0_17] : memref<1x1x32xf32, #tpu.memory_space<vmem>>, vector<1x1x32xf32>
    %15 = vector.shape_cast %14 : vector<1x1x32xf32> to vector<1x32xf32>
    %16 = vector.broadcast %15 : vector<1x32xf32> to vector<128x32xf32>
    %17 = arith.addf %13, %16 : vector<128x32xf32>
    %c0_18 = arith.constant 0 : index
    %c0_19 = arith.constant 0 : index
    %c0_20 = arith.constant 0 : index
    %18 = vector.load %arg8[%c0_18, %c0_19, %c0_20] : memref<1x64x32xbf16, #tpu.memory_space<vmem>>, vector<1x64x32xbf16>
    %19 = vector.shape_cast %18 : vector<1x64x32xbf16> to vector<64x32xbf16>
    %cst_21 = arith.constant dense<0.000000e+00> : vector<128x32xf32>
    %20 = tpu.matmul %3, %19, %cst_21 {dimension_numbers = #tpu.dot_dimension_numbers<[1], [0], [0], [1], [0, 0, 1, 1], [], []>} : vector<128x64xbf16>, vector<64x32xbf16>, vector<128x32xf32> -> vector<128x32xf32>
    %c0_22 = arith.constant 0 : index
    %c0_23 = arith.constant 0 : index
    %c0_24 = arith.constant 0 : index
    %21 = vector.load %arg9[%c0_22, %c0_23, %c0_24] : memref<1x1x32xf32, #tpu.memory_space<vmem>>, vector<1x1x32xf32>
    %22 = vector.shape_cast %21 : vector<1x1x32xf32> to vector<1x32xf32>
    %23 = vector.broadcast %22 : vector<1x32xf32> to vector<128x32xf32>
    %24 = arith.addf %20, %23 : vector<128x32xf32>
    %25 = vector.shape_cast %10 : vector<64x32xf32> to vector<8x8x32xf32>
    %26 = arith.truncf %25 : vector<8x8x32xf32> to vector<8x8x32xbf16>
    %27 = vector.shape_cast %17 : vector<128x32xf32> to vector<8x16x32xf32>
    %28 = arith.truncf %27 : vector<8x16x32xf32> to vector<8x16x32xbf16>
    %29 = vector.shape_cast %24 : vector<128x32xf32> to vector<8x16x32xf32>
    %30 = arith.truncf %29 : vector<8x16x32xf32> to vector<8x16x32xbf16>
    "tpu.trace_start"() <{level = 10 : i32, message = "kcd,kld->kcl"}> : () -> ()
    %cst_25 = arith.constant dense<0.000000e+00> : vector<8x8x16xf32>
    %31 = tpu.matmul %26, %28, %cst_25 {dimension_numbers = #tpu.dot_dimension_numbers<[2], [2], [1], [1], [0, 0, 0, 1, 1, 1], [0], [0]>} : vector<8x8x32xbf16>, vector<8x16x32xbf16>, vector<8x8x16xf32> -> vector<8x8x16xf32>
    "tpu.trace_stop"() : () -> ()
    %cst_26 = arith.constant dense<0xFF800000> : vector<8x8xf32>
    %32 = vector.multi_reduction <maximumf>, %31, %cst_26 [2] : vector<8x8x16xf32> to vector<8x8xf32>
    %33 = vector.shape_cast %32 : vector<8x8xf32> to vector<8x8x1xf32>
    %34 = vector.broadcast %33 : vector<8x8x1xf32> to vector<8x8x16xf32>
    %35 = arith.subf %31, %34 : vector<8x8x16xf32>
    %36 = math.exp %35 : vector<8x8x16xf32>
    %cst_27 = arith.constant dense<0.000000e+00> : vector<8x8xf32>
    %37 = vector.multi_reduction <add>, %36, %cst_27 [2] : vector<8x8x16xf32> to vector<8x8xf32>
    %38 = vector.shape_cast %37 : vector<8x8xf32> to vector<8x8x1xf32>
    %39 = tpu.reciprocal %38 {approx = true} : vector<8x8x1xf32> -> vector<8x8x1xf32>
    %40 = vector.broadcast %39 : vector<8x8x1xf32> to vector<8x8x16xf32>
    %41 = arith.mulf %36, %40 : vector<8x8x16xf32>
    %42 = arith.truncf %41 : vector<8x8x16xf32> to vector<8x8x16xbf16>
    "tpu.trace_start"() <{level = 10 : i32, message = "kcl,kld->kcd"}> : () -> ()
    %cst_28 = arith.constant dense<0.000000e+00> : vector<8x8x32xf32>
    %43 = tpu.matmul %42, %30, %cst_28 {dimension_numbers = #tpu.dot_dimension_numbers<[2], [1], [1], [2], [0, 0, 0, 1, 1, 2], [0], [0]>} : vector<8x8x16xbf16>, vector<8x16x32xbf16>, vector<8x8x32xf32> -> vector<8x8x32xf32>
    "tpu.trace_stop"() : () -> ()
    %c0_29 = arith.constant 0 : index
    %c0_30 = arith.constant 0 : index
    %c0_31 = arith.constant 0 : index
    %c0_32 = arith.constant 0 : index
    %44 = vector.load %arg10[%c0_29, %c0_30, %c0_31, %c0_32] : memref<1x8x8x32xf32, #tpu.memory_space<vmem>>, vector<1x8x8x32xf32>
    %45 = vector.shape_cast %44 : vector<1x8x8x32xf32> to vector<8x8x32xf32>
    %46 = vector.shape_cast %43 : vector<8x8x32xf32> to vector<1x8x8x32xf32>
    tpu.vector_store %arg10[%c0_29, %c0_30, %c0_31, %c0_32], %46 {strides = array<i32>} : memref<1x8x8x32xf32, #tpu.memory_space<vmem>>, vector<1x8x8x32xf32>,
    return
  }
  func.func @transform_0(%arg0: i32, %arg1: i32) -> (i32, i32, i32) {
    %c0_i32 = arith.constant 0 : i32
    %c0_i32_0 = arith.constant 0 : i32
    %c0_i32_1 = arith.constant 0 : i32
    return %arg0, %c0_i32, %c0_i32_0 : i32, i32, i32
  }
  func.func @transform_1(%arg0: i32, %arg1: i32) -> (i32, i32, i32) {
    %c0_i32 = arith.constant 0 : i32
    %c0_i32_0 = arith.constant 0 : i32
    %c0_i32_1 = arith.constant 0 : i32
    return %arg0, %c0_i32, %c0_i32_0 : i32, i32, i32
  }
  func.func @transform_2(%arg0: i32, %arg1: i32) -> (i32, i32, i32) {
    %c0_i32 = arith.constant 0 : i32
    %c0_i32_0 = arith.constant 0 : i32
    %c0_i32_1 = arith.constant 0 : i32
    return %arg1, %c0_i32, %c0_i32_0 : i32, i32, i32
  }
  func.func @transform_3(%arg0: i32, %arg1: i32) -> (i32, i32, i32) {
    %c0_i32 = arith.constant 0 : i32
    %c0_i32_0 = arith.constant 0 : i32
    %c0_i32_1 = arith.constant 0 : i32
    return %arg1, %c0_i32, %c0_i32_0 : i32, i32, i32
  }
  func.func @transform_4(%arg0: i32, %arg1: i32) -> (i32, i32, i32) {
    %c0_i32 = arith.constant 0 : i32
    %c0_i32_0 = arith.constant 0 : i32
    %c0_i32_1 = arith.constant 0 : i32
    return %arg1, %c0_i32, %c0_i32_0 : i32, i32, i32
  }
  func.func @transform_5(%arg0: i32, %arg1: i32) -> (i32, i32, i32) {
    %c0_i32 = arith.constant 0 : i32
    %c0_i32_0 = arith.constant 0 : i32
    %c0_i32_1 = arith.constant 0 : i32
    return %arg1, %c0_i32, %c0_i32_0 : i32, i32, i32
  }
  func.func @transform_6(%arg0: i32, %arg1: i32) -> (i32, i32, i32) {
    %c0_i32 = arith.constant 0 : i32
    %c0_i32_0 = arith.constant 0 : i32
    %c0_i32_1 = arith.constant 0 : i32
    return %arg1, %c0_i32, %c0_i32_0 : i32, i32, i32
  }
  func.func @transform_7(%arg0: i32, %arg1: i32) -> (i32, i32, i32) {
    %c0_i32 = arith.constant 0 : i32
    %c0_i32_0 = arith.constant 0 : i32
    %c0_i32_1 = arith.constant 0 : i32
    return %arg1, %c0_i32, %c0_i32_0 : i32, i32, i32
  }
  func.func @transform_8(%arg0: i32, %arg1: i32) -> (i32, i32, i32, i32) {
    %c0_i32 = arith.constant 0 : i32
    %c0_i32_0 = arith.constant 0 : i32
    %c0_i32_1 = arith.constant 0 : i32
    return %arg1, %arg0, %c0_i32, %c0_i32_0 : i32, i32, i32, i32
  }
}

</mosaic_0001>

<llo_original>
// kernel: tpu_custom_call.1
$region0: #{tpu_custom_call.1}
  #allocation0 [shape = 'u32[]', space=smem, size = 0x4, offset = 0x4, fixed_abs, tag = 'smem constant byte address 0x4 - core index']
  #allocation1 [shape = 'u32[144,128]{1,0:T(1,128)}', space=vmem, size = 0x12000, scoped, tag = 'internal scratch']
  %s0 = inlined_call_operand.vmem [shape: bf16[8,8,128], index: 0, kind: input, shape index: {}]
  %s1 = inlined_call_operand.vmem [shape: bf16[8,16,64], index: 1, kind: input, shape index: {}]
  %s2 = inlined_call_operand.vmem [shape: bf16[4,128,32], index: 2, kind: input, shape index: {}]
  %s3 = inlined_call_operand.vmem [shape: f32[4,1,32], index: 3, kind: input, shape index: {}]
  %s4 = inlined_call_operand.vmem [shape: bf16[4,64,32], index: 4, kind: input, shape index: {}]
  %s5 = inlined_call_operand.vmem [shape: f32[4,1,32], index: 5, kind: input, shape index: {}]
  %s6 = inlined_call_operand.vmem [shape: bf16[4,64,32], index: 6, kind: input, shape index: {}]
  %s7 = inlined_call_operand.vmem [shape: f32[4,1,32], index: 7, kind: input, shape index: {}]
  %s8 = inlined_call_operand.hbm [shape: f32[4,8,8,32], index: 8, kind: output, shape index: {}]
  %s9 = sld [smem:[#allocation0]]
  $region65: #{tpu_custom_call.1} parent=0
    _
  %s11 = ssub.s32 1, %s9
  %s12 = scalar_select 0, %s11, %s9
  $region1: #{tpu_custom_call.1} parent=0
    #allocation2 [shape = 'u8[65536]{0}', space=vmem, size = 0x10000, scoped, tag = 'output window, operand 0']
    #allocation3 [shape = 's32[2]{0}', space=sflag, size = 0x8, scoped, tag = 'scoped memory for tpu_custom_call.1']
    %13 = vsyncpa [#allocation3], 0
    %s14 = scalar_lea.sflag [#allocation3], 1
    %15 = vsyncpa %s14, 0
    loop: start=0, step=1, limit=6
    $region2: #{tpu_custom_call.1} parent=1 // loop_pre_header
      _
    $region3: #{tpu_custom_call.1} parent=1 // loop_header
      %s17 = sphi 0, %s21
      %p18 = scmp.ge.s32.totalorder %s17, 6
      %s24 = sphi 0, %s36
      %s25 = sphi 0, %s32
      %s26 = sphi 0, %s24
      %s27 = sphi 0, %s25
      %s28 = sphi 0, %s26
      %s29 = sphi 0, %s27
      %s39 = sphi 0, %s41
      %s42 = sphi 0, %s39
      %s43 = sphi 0, %s42
      %s59 = sphi 0, %s43
      %s65 = sphi 0, %s67
      %s68 = sphi 0, %s65
      %s69 = sphi 0, %s68
      %s85 = sphi 0, %s69
      %s91 = sphi 0, %s93
      %s94 = sphi 0, %s91
      %s95 = sphi 0, %s94
      %s111 = sphi 0, %s95
      %s117 = sphi 0, %s119
      %s120 = sphi 0, %s117
      %s121 = sphi 0, %s120
      %s137 = sphi 0, %s121
      %s143 = sphi 0, %s145
      %s146 = sphi 0, %s143
      %s147 = sphi 0, %s146
      %s163 = sphi 0, %s147
      %s169 = sphi 0, %s171
      %s172 = sphi 0, %s169
      %s173 = sphi 0, %s172
      %s189 = sphi 0, %s173
      %s195 = sphi 0, %s197
      %s198 = sphi 0, %s195
      %s199 = sphi 0, %s198
      %s215 = sphi 0, %s199
      %s221 = sphi 0, %s223
      %s224 = sphi 0, %s221
      %s225 = sphi 0, %s224
      %s241 = sphi 0, %s225
      %s249 = sphi 0, %s251
      %s252 = sphi 0, %s249
      %s253 = sphi 0, %s252
      %s269 = sphi 0, %s253
    $region4: #{tpu_custom_call.1} parent=1 // loop_header_branch
      %20 = sbr.rel (%p18) target = $region8
    $region5: #{tpu_custom_call.1} parent=1 // loop_body
      %s22 = ssub.s32 %s17, 1
      %s23 = ssub.s32 %s17, 2
      %s30 = sadd.s32 1, %s25
      %p31 = scmp.ge.s32.totalorder %s30, 4
      %s32 = scalar_select %p31, 0, %s30
      %s33 = sadd.s32 1, %s24
      %s34 = scalar_select %p31, %s33, %s24
      %p35 = scmp.ge.s32.totalorder %s34, 1
      %s36 = scalar_select %p35, 0, %s34
      %s37 = ssub.s32 %s24, %s36
      %p38 = scmp.eq.s32.totalorder %s37, 0
      %s40 = sadd.s32 %s39, 1
      %s41 = scalar_select %p38, %s39, %s40
      %p44 = pneg %p38
      %p45 = scmp.eq.s32.totalorder %s17, 3
      %p46 = por %p44, %p45
      %p47 = scmp.ne.s32.totalorder %s39, %s42
      %p48 = scmp.eq.s32.totalorder %s17, 0
      %p49 = por %p47, %p48
      %p50 = scmp.ne.s32.totalorder %s39, %s42
      %p51 = scmp.eq.s32.totalorder %s22, 3
      %p52 = por %p50, %p51
      %p53 = scmp.ne.s32.totalorder %s42, %s43
      %p54 = scmp.eq.s32.totalorder %s22, 0
      %p55 = por %p53, %p54
      %p56 = scmp.ne.s32.totalorder %s42, %s43
      %p57 = scmp.eq.s32.totalorder %s23, 3
      %p58 = por %p56, %p57
      %p60 = scmp.ne.s32.totalorder %s43, %s59
      %p61 = scmp.eq.s32.totalorder %s23, 0
      %p62 = por %p60, %p61
      %s63 = ssub.s32 %s24, %s36
      %p64 = scmp.eq.s32.totalorder %s63, 0
      %s66 = sadd.s32 %s65, 1
      %s67 = scalar_select %p64, %s65, %s66
      %p70 = pneg %p64
      %p71 = scmp.eq.s32.totalorder %s17, 3
      %p72 = por %p70, %p71
      %p73 = scmp.ne.s32.totalorder %s65, %s68
      %p74 = scmp.eq.s32.totalorder %s17, 0
      %p75 = por %p73, %p74
      %p76 = scmp.ne.s32.totalorder %s65, %s68
      %p77 = scmp.eq.s32.totalorder %s22, 3
      %p78 = por %p76, %p77
      %p79 = scmp.ne.s32.totalorder %s68, %s69
      %p80 = scmp.eq.s32.totalorder %s22, 0
      %p81 = por %p79, %p80
      %p82 = scmp.ne.s32.totalorder %s68, %s69
      %p83 = scmp.eq.s32.totalorder %s23, 3
      %p84 = por %p82, %p83
      %p86 = scmp.ne.s32.totalorder %s69, %s85
      %p87 = scmp.eq.s32.totalorder %s23, 0
      %p88 = por %p86, %p87
      %s89 = ssub.s32 %s25, %s32
      %p90 = scmp.eq.s32.totalorder %s89, 0
      %s92 = sadd.s32 %s91, 1
      %s93 = scalar_select %p90, %s91, %s92
      %p96 = pneg %p90
      %p97 = scmp.eq.s32.totalorder %s17, 3
      %p98 = por %p96, %p97
      %p99 = scmp.ne.s32.totalorder %s91, %s94
      %p100 = scmp.eq.s32.totalorder %s17, 0
      %p101 = por %p99, %p100
      %p102 = scmp.ne.s32.totalorder %s91, %s94
      %p103 = scmp.eq.s32.totalorder %s22, 3
      %p104 = por %p102, %p103
      %p105 = scmp.ne.s32.totalorder %s94, %s95
      %p106 = scmp.eq.s32.totalorder %s22, 0
      %p107 = por %p105, %p106
      %p108 = scmp.ne.s32.totalorder %s94, %s95
      %p109 = scmp.eq.s32.totalorder %s23, 3
      %p110 = por %p108, %p109
      %p112 = scmp.ne.s32.totalorder %s95, %s111
      %p113 = scmp.eq.s32.totalorder %s23, 0
      %p114 = por %p112, %p113
      %s115 = ssub.s32 %s25, %s32
      %p116 = scmp.eq.s32.totalorder %s115, 0
      %s118 = sadd.s32 %s117, 1
      %s119 = scalar_select %p116, %s117, %s118
      %p122 = pneg %p116
      %p123 = scmp.eq.s32.totalorder %s17, 3
      %p124 = por %p122, %p123
      %p125 = scmp.ne.s32.totalorder %s117, %s120
      %p126 = scmp.eq.s32.totalorder %s17, 0
      %p127 = por %p125, %p126
      %p128 = scmp.ne.s32.totalorder %s117, %s120
      %p129 = scmp.eq.s32.totalorder %s22, 3
      %p130 = por %p128, %p129
      %p131 = scmp.ne.s32.totalorder %s120, %s121
      %p132 = scmp.eq.s32.totalorder %s22, 0
      %p133 = por %p131, %p132
      %p134 = scmp.ne.s32.totalorder %s120, %s121
      %p135 = scmp.eq.s32.totalorder %s23, 3
      %p136 = por %p134, %p135
      %p138 = scmp.ne.s32.totalorder %s121, %s137
      %p139 = scmp.eq.s32.totalorder %s23, 0
      %p140 = por %p138, %p139
      %s141 = ssub.s32 %s25, %s32
      %p142 = scmp.eq.s32.totalorder %s141, 0
      %s144 = sadd.s32 %s143, 1
      %s145 = scalar_select %p142, %s143, %s144
      %p148 = pneg %p142
      %p149 = scmp.eq.s32.totalorder %s17, 3
      %p150 = por %p148, %p149
      %p151 = scmp.ne.s32.totalorder %s143, %s146
      %p152 = scmp.eq.s32.totalorder %s17, 0
      %p153 = por %p151, %p152
      %p154 = scmp.ne.s32.totalorder %s143, %s146
      %p155 = scmp.eq.s32.totalorder %s22, 3
      %p156 = por %p154, %p155
      %p157 = scmp.ne.s32.totalorder %s146, %s147
      %p158 = scmp.eq.s32.totalorder %s22, 0
      %p159 = por %p157, %p158
      %p160 = scmp.ne.s32.totalorder %s146, %s147
      %p161 = scmp.eq.s32.totalorder %s23, 3
      %p162 = por %p160, %p161
      %p164 = scmp.ne.s32.totalorder %s147, %s163
      %p165 = scmp.eq.s32.totalorder %s23, 0
      %p166 = por %p164, %p165
      %s167 = ssub.s32 %s25, %s32
      %p168 = scmp.eq.s32.totalorder %s167, 0
      %s170 = sadd.s32 %s169, 1
      %s171 = scalar_select %p168, %s169, %s170
      %p174 = pneg %p168
      %p175 = scmp.eq.s32.totalorder %s17, 3
      %p176 = por %p174, %p175
      %p177 = scmp.ne.s32.totalorder %s169, %s172
      %p178 = scmp.eq.s32.totalorder %s17, 0
      %p179 = por %p177, %p178
      %p180 = scmp.ne.s32.totalorder %s169, %s172
      %p181 = scmp.eq.s32.totalorder %s22, 3
      %p182 = por %p180, %p181
      %p183 = scmp.ne.s32.totalorder %s172, %s173
      %p184 = scmp.eq.s32.totalorder %s22, 0
      %p185 = por %p183, %p184
      %p186 = scmp.ne.s32.totalorder %s172, %s173
      %p187 = scmp.eq.s32.totalorder %s23, 3
      %p188 = por %p186, %p187
      %p190 = scmp.ne.s32.totalorder %s173, %s189
      %p191 = scmp.eq.s32.totalorder %s23, 0
      %p192 = por %p190, %p191
      %s193 = ssub.s32 %s25, %s32
      %p194 = scmp.eq.s32.totalorder %s193, 0
      %s196 = sadd.s32 %s195, 1
      %s197 = scalar_select %p194, %s195, %s196
      %p200 = pneg %p194
      %p201 = scmp.eq.s32.totalorder %s17, 3
      %p202 = por %p200, %p201
      %p203 = scmp.ne.s32.totalorder %s195, %s198
      %p204 = scmp.eq.s32.totalorder %s17, 0
      %p205 = por %p203, %p204
      %p206 = scmp.ne.s32.totalorder %s195, %s198
      %p207 = scmp.eq.s32.totalorder %s22, 3
      %p208 = por %p206, %p207
      %p209 = scmp.ne.s32.totalorder %s198, %s199
      %p210 = scmp.eq.s32.totalorder %s22, 0
      %p211 = por %p209, %p210
      %p212 = scmp.ne.s32.totalorder %s198, %s199
      %p213 = scmp.eq.s32.totalorder %s23, 3
      %p214 = por %p212, %p213
      %p216 = scmp.ne.s32.totalorder %s199, %s215
      %p217 = scmp.eq.s32.totalorder %s23, 0
      %p218 = por %p216, %p217
      %s219 = ssub.s32 %s25, %s32
      %p220 = scmp.eq.s32.totalorder %s219, 0
      %s222 = sadd.s32 %s221, 1
      %s223 = scalar_select %p220, %s221, %s222
      %p226 = pneg %p220
      %p227 = scmp.eq.s32.totalorder %s17, 3
      %p228 = por %p226, %p227
      %p229 = scmp.ne.s32.totalorder %s221, %s224
      %p230 = scmp.eq.s32.totalorder %s17, 0
      %p231 = por %p229, %p230
      %p232 = scmp.ne.s32.totalorder %s221, %s224
      %p233 = scmp.eq.s32.totalorder %s22, 3
      %p234 = por %p232, %p233
      %p235 = scmp.ne.s32.totalorder %s224, %s225
      %p236 = scmp.eq.s32.totalorder %s22, 0
      %p237 = por %p235, %p236
      %p238 = scmp.ne.s32.totalorder %s224, %s225
      %p239 = scmp.eq.s32.totalorder %s23, 3
      %p240 = por %p238, %p239
      %p242 = scmp.ne.s32.totalorder %s225, %s241
      %p243 = scmp.eq.s32.totalorder %s23, 0
      %p244 = por %p242, %p243
      %s245 = ssub.s32 %s25, %s32
      %s246 = ssub.s32 %s24, %s36
      %s247 = sor.u32 %s245, %s246
      %p248 = scmp.eq.s32.totalorder %s247, 0
      %s250 = sadd.s32 %s249, 1
      %s251 = scalar_select %p248, %s249, %s250
      %p254 = pneg %p248
      %p255 = scmp.eq.s32.totalorder %s17, 3
      %p256 = por %p254, %p255
      %p257 = scmp.ne.s32.totalorder %s249, %s252
      %p258 = scmp.eq.s32.totalorder %s17, 0
      %p259 = por %p257, %p258
      %p260 = scmp.ne.s32.totalorder %s249, %s252
      %p261 = scmp.eq.s32.totalorder %s22, 3
      %p262 = por %p260, %p261
      %p263 = scmp.ne.s32.totalorder %s252, %s253
      %p264 = scmp.eq.s32.totalorder %s22, 0
      %p265 = por %p263, %p264
      %p266 = scmp.ne.s32.totalorder %s252, %s253
      %p267 = scmp.eq.s32.totalorder %s23, 3
      %p268 = por %p266, %p267
      %p270 = scmp.ne.s32.totalorder %s253, %s269
      %p271 = scmp.eq.s32.totalorder %s23, 0
      %p272 = por %p270, %p271
      %p273 = scmp.le.s32.totalorder 1, %s17
      %p274 = scmp.lt.s32.totalorder %s17, 5
      %p275 = pnand %p273, %p274
      %p276 = pneg %p275
      // Predicated region
      $region9: #{tpu_custom_call.1} parent=5 // pred_check
        _
      $region10: #{tpu_custom_call.1} parent=5 // pred_check_branch
        %278 = sbr.rel (%p275) target = $region12
      $region11: #{tpu_custom_call.1} parent=5 // pred_region
        %s279 = ssub.s32 %s17, 1
        // Predicated region
        $region13: #{tpu_custom_call.1} parent=11 // pred_check
          %p280 = pneg %p55
        $region14: #{tpu_custom_call.1} parent=11 // pred_check_branch
          %282 = sbr.rel (%p280) target = $region16
        $region15: #{tpu_custom_call.1} parent=11 // pred_region
          %s283 = smul.u32 8, %s26
          %p284 = scmp.lt.s32.totalorder %s283, 7
          %s285 = scalar_select %p284, %s283, 7
          %s286 = smul.addr %s285, 4
          %s287 = scalar_lea.vmem %s0, %s286
          %s288 = smul.u32 8, %s26
        $region16: #{tpu_custom_call.1} parent=11 // pred_fallthru
          _
        // Predicated region
        $region17: #{tpu_custom_call.1} parent=11 // pred_check
          %p289 = pneg %p81
        $region18: #{tpu_custom_call.1} parent=11 // pred_check_branch
          %291 = sbr.rel (%p289) target = $region20
        $region19: #{tpu_custom_call.1} parent=11 // pred_region
          %s292 = smul.u32 8, %s26
          %p293 = scmp.lt.s32.totalorder %s292, 7
          %s294 = scalar_select %p293, %s292, 7
          %s295 = smul.addr %s294, 2
          %s296 = smul.addr %s295, 4
          %s297 = scalar_lea.vmem %s1, %s296
          %s298 = smul.u32 8, %s26
        $region20: #{tpu_custom_call.1} parent=11 // pred_fallthru
          _
      $region12: #{tpu_custom_call.1} parent=5 // pred_fallthru
        _
      %p299 = scmp.lt.s32.totalorder %s17, 4
      // Predicated region
      $region21: #{tpu_custom_call.1} parent=5 // pred_check
        %p300 = pneg %p299
      $region22: #{tpu_custom_call.1} parent=5 // pred_check_branch
        %302 = sbr.rel (%p300) target = $region24
      $region23: #{tpu_custom_call.1} parent=5 // pred_region
        // Predicated region
        $region25: #{tpu_custom_call.1} parent=23 // pred_check
          %p303 = pneg %p101
        $region26: #{tpu_custom_call.1} parent=23 // pred_check_branch
          %305 = sbr.rel (%p303) target = $region28
        $region27: #{tpu_custom_call.1} parent=23 // pred_region
          %p306 = scmp.lt.s32.totalorder %s25, 3
          %s307 = scalar_select %p306, %s25, 3
          %s308 = smul.addr %s307, 16
          %s309 = smul.addr %s308, 4
          %s310 = scalar_lea.vmem %s2, %s309
        $region28: #{tpu_custom_call.1} parent=23 // pred_fallthru
          _
        // Predicated region
        $region29: #{tpu_custom_call.1} parent=23 // pred_check
          %p311 = pneg %p127
        $region30: #{tpu_custom_call.1} parent=23 // pred_check_branch
          %313 = sbr.rel (%p311) target = $region32
        $region31: #{tpu_custom_call.1} parent=23 // pred_region
          %p314 = scmp.lt.s32.totalorder %s25, 3
          %s315 = scalar_select %p314, %s25, 3
          %s316 = scalar_lea.vmem %s3, %s315
        $region32: #{tpu_custom_call.1} parent=23 // pred_fallthru
          _
        // Predicated region
        $region33: #{tpu_custom_call.1} parent=23 // pred_check
          %p317 = pneg %p153
        $region34: #{tpu_custom_call.1} parent=23 // pred_check_branch
          %319 = sbr.rel (%p317) target = $region36
        $region35: #{tpu_custom_call.1} parent=23 // pred_region
          %p320 = scmp.lt.s32.totalorder %s25, 3
          %s321 = scalar_select %p320, %s25, 3
          %s322 = smul.addr %s321, 8
          %s323 = smul.addr %s322, 4
          %s324 = scalar_lea.vmem %s4, %s323
        $region36: #{tpu_custom_call.1} parent=23 // pred_fallthru
          _
        // Predicated region
        $region37: #{tpu_custom_call.1} parent=23 // pred_check
          %p325 = pneg %p179
        $region38: #{tpu_custom_call.1} parent=23 // pred_check_branch
          %327 = sbr.rel (%p325) target = $region40
        $region39: #{tpu_custom_call.1} parent=23 // pred_region
          %p328 = scmp.lt.s32.totalorder %s25, 3
          %s329 = scalar_select %p328, %s25, 3
          %s330 = scalar_lea.vmem %s5, %s329
        $region40: #{tpu_custom_call.1} parent=23 // pred_fallthru
          _
        // Predicated region
        $region41: #{tpu_custom_call.1} parent=23 // pred_check
          %p331 = pneg %p205
        $region42: #{tpu_custom_call.1} parent=23 // pred_check_branch
          %333 = sbr.rel (%p331) target = $region44
        $region43: #{tpu_custom_call.1} parent=23 // pred_region
          %p334 = scmp.lt.s32.totalorder %s25, 3
          %s335 = scalar_select %p334, %s25, 3
          %s336 = smul.addr %s335, 8
          %s337 = smul.addr %s336, 4
          %s338 = scalar_lea.vmem %s6, %s337
        $region44: #{tpu_custom_call.1} parent=23 // pred_fallthru
          _
        // Predicated region
        $region45: #{tpu_custom_call.1} parent=23 // pred_check
          %p339 = pneg %p231
        $region46: #{tpu_custom_call.1} parent=23 // pred_check_branch
          %341 = sbr.rel (%p339) target = $region48
        $region47: #{tpu_custom_call.1} parent=23 // pred_region
          %p342 = scmp.lt.s32.totalorder %s25, 3
          %s343 = scalar_select %p342, %s25, 3
          %s344 = scalar_lea.vmem %s7, %s343
        $region48: #{tpu_custom_call.1} parent=23 // pred_fallthru
          _
      $region24: #{tpu_custom_call.1} parent=5 // pred_fallthru
        _
      %p345 = scmp.le.s32.totalorder 1, %s17
      %p346 = scmp.lt.s32.totalorder %s17, 5
      %p347 = pnand %p345, %p346
      %p348 = pneg %p347
      // Predicated region
      $region49: #{tpu_custom_call.1} parent=5 // pred_check
        _
      $region50: #{tpu_custom_call.1} parent=5 // pred_check_branch
        %350 = sbr.rel (%p347) target = $region52
      $region51: #{tpu_custom_call.1} parent=5 // pred_region
        %s351 = ssub.s32 %s17, 1
        %s352 = smul.u32 8, %s26
        %p353 = scmp.lt.s32.totalorder %s352, 7
        %s354 = scalar_select %p353, %s352, 7
        %s355 = smul.addr %s354, 4
        %s356 = scalar_lea.vmem %s0, %s355
        %p357 = pneg %p55
        %p358 = pneg %p52
        %s359 = smul.u32 8, %s26
        %p360 = scmp.lt.s32.totalorder %s359, 7
        %s361 = scalar_select %p360, %s359, 7
        %s362 = smul.addr %s361, 2
        %s363 = smul.addr %s362, 4
        %s364 = scalar_lea.vmem %s1, %s363
        %p365 = pneg %p81
        %p366 = pneg %p78
        %p367 = scmp.lt.s32.totalorder %s27, 3
        %s368 = scalar_select %p367, %s27, 3
        %s369 = smul.addr %s368, 16
        %s370 = smul.addr %s369, 4
        %s371 = scalar_lea.vmem %s2, %s370
        %p372 = pneg %p107
        %p373 = pneg %p104
        %p374 = scmp.lt.s32.totalorder %s27, 3
        %s375 = scalar_select %p374, %s27, 3
        %s376 = scalar_lea.vmem %s3, %s375
        %p377 = pneg %p133
        %p378 = pneg %p130
        %p379 = scmp.lt.s32.totalorder %s27, 3
        %s380 = scalar_select %p379, %s27, 3
        %s381 = smul.addr %s380, 8
        %s382 = smul.addr %s381, 4
        %s383 = scalar_lea.vmem %s4, %s382
        %p384 = pneg %p159
        %p385 = pneg %p156
        %p386 = scmp.lt.s32.totalorder %s27, 3
        %s387 = scalar_select %p386, %s27, 3
        %s388 = scalar_lea.vmem %s5, %s387
        %p389 = pneg %p185
        %p390 = pneg %p182
        %p391 = scmp.lt.s32.totalorder %s27, 3
        %s392 = scalar_select %p391, %s27, 3
        %s393 = smul.addr %s392, 8
        %s394 = smul.addr %s393, 4
        %s395 = scalar_lea.vmem %s6, %s394
        %p396 = pneg %p211
        %p397 = pneg %p208
        %p398 = scmp.lt.s32.totalorder %s27, 3
        %s399 = scalar_select %p398, %s27, 3
        %s400 = scalar_lea.vmem %s7, %s399
        %p401 = pneg %p237
        %p402 = pneg %p234
        %p403 = pneg %p265
        %p404 = pneg %p262
        %s405 = sand.u32 %s252, 1
        %s406 = scalar_lea.sflag [#allocation3], %s405
        %s407 = sand.u32 %s252, 1
        %s408 = smul.addr %s407, 64
        %s409 = scalar_lea.vmem [#allocation2], %s408
        %s410 = smul.u32 8, %s26
        %p411 = scmp.lt.s32.totalorder %s410, 7
        %s412 = scalar_select %p411, %s410, 7
        %s413 = smul.addr %s412, 4
        %s414 = scalar_lea.vmem %s0, %s413
        %s415 = smul.u32 8, %s26
        %s416 = smul.u32 8, %s26
        %p417 = scmp.lt.s32.totalorder %s416, 7
        %s418 = scalar_select %p417, %s416, 7
        %s419 = smul.addr %s418, 2
        %s420 = smul.addr %s419, 4
        %s421 = scalar_lea.vmem %s1, %s420
        %s422 = smul.u32 8, %s26
        %p423 = scmp.lt.s32.totalorder %s27, 3
        %s424 = scalar_select %p423, %s27, 3
        %s425 = smul.addr %s424, 16
        %s426 = smul.addr %s425, 4
        %s427 = scalar_lea.vmem %s2, %s426
        %p428 = scmp.lt.s32.totalorder %s27, 3
        %s429 = scalar_select %p428, %s27, 3
        %s430 = scalar_lea.vmem %s3, %s429
        %p431 = scmp.lt.s32.totalorder %s27, 3
        %s432 = scalar_select %p431, %s27, 3
        %s433 = smul.addr %s432, 8
        %s434 = smul.addr %s433, 4
        %s435 = scalar_lea.vmem %s4, %s434
        %p436 = scmp.lt.s32.totalorder %s27, 3
        %s437 = scalar_select %p436, %s27, 3
        %s438 = scalar_lea.vmem %s5, %s437
        %p439 = scmp.lt.s32.totalorder %s27, 3
        %s440 = scalar_select %p439, %s27, 3
        %s441 = smul.addr %s440, 8
        %s442 = smul.addr %s441, 4
        %s443 = scalar_lea.vmem %s6, %s442
        %p444 = scmp.lt.s32.totalorder %s27, 3
        %s445 = scalar_select %p444, %s27, 3
        %s446 = scalar_lea.vmem %s7, %s445
        %s447 = smul.u32 8, %s26
        %v449 = vld [vmem:[%s414] sm:$0xf]
        %v450 = vld [vmem:[%s414 + $0x4] sm:$0xf]
        %v451 = vld [vmem:[%s414 + $0x8] sm:$0xf]
        %v452 = vld [vmem:[%s414 + $0xc] sm:$0xf]
        %v453 = vld [vmem:[%s414 + $0x10] sm:$0xf]
        %v454 = vld [vmem:[%s414 + $0x14] sm:$0xf]
        %v455 = vld [vmem:[%s414 + $0x18] sm:$0xf]
        %v456 = vld [vmem:[%s414 + $0x1c] sm:$0xf]
        %v457 = vld [vmem:[%s421] sm:$0xf]
        %v458 = vld [vmem:[%s421 + $0x4] sm:$0xf]
        %v459 = vld [vmem:[%s421 + $0x8] sm:$0xf]
        %v460 = vld [vmem:[%s421 + $0xc] sm:$0xf]
        %v461 = vld [vmem:[%s421 + $0x10] sm:$0xf]
        %v462 = vld [vmem:[%s421 + $0x14] sm:$0xf]
        %v463 = vld [vmem:[%s421 + $0x18] sm:$0xf]
        %v464 = vld [vmem:[%s421 + $0x1c] sm:$0xf]
        %v465 = vld [vmem:[%s421 + $0x20] sm:$0xf]
        %v466 = vld [vmem:[%s421 + $0x24] sm:$0xf]
        %v467 = vld [vmem:[%s421 + $0x28] sm:$0xf]
        %v468 = vld [vmem:[%s421 + $0x2c] sm:$0xf]
        %v469 = vld [vmem:[%s421 + $0x30] sm:$0xf]
        %v470 = vld [vmem:[%s421 + $0x34] sm:$0xf]
        %v471 = vld [vmem:[%s421 + $0x38] sm:$0xf]
        %v472 = vld [vmem:[%s421 + $0x3c] sm:$0xf]
        %v473 = vld [vmem:[%s427] sm:$0xf]
        %v474 = vld [vmem:[%s427 + $0x4] sm:$0xf]
        %v475 = vld [vmem:[%s427 + $0x8] sm:$0xf]
        %v476 = vld [vmem:[%s427 + $0xc] sm:$0xf]
        %v477 = vld [vmem:[%s427 + $0x10] sm:$0xf]
        %v478 = vld [vmem:[%s427 + $0x14] sm:$0xf]
        %v479 = vld [vmem:[%s427 + $0x18] sm:$0xf]
        %v480 = vld [vmem:[%s427 + $0x1c] sm:$0xf]
        %v481 = vld [vmem:[%s427 + $0x20] sm:$0xf]
        %v482 = vld [vmem:[%s427 + $0x24] sm:$0xf]
        %v483 = vld [vmem:[%s427 + $0x28] sm:$0xf]
        %v484 = vld [vmem:[%s427 + $0x2c] sm:$0xf]
        %v485 = vld [vmem:[%s427 + $0x30] sm:$0xf]
        %v486 = vld [vmem:[%s427 + $0x34] sm:$0xf]
        %v487 = vld [vmem:[%s427 + $0x38] sm:$0xf]
        %v488 = vld [vmem:[%s427 + $0x3c] sm:$0xf]
        %v489 = vld [vmem:[%s430] sm:$0x1]
        %v491 = vlaneseq
        %v492 = vshrl.u32 %v491, 7
        %v493 = vsub.s32 0, %v492
        %v494 = vrot.slane %v489, %v493
        %v504 = vunpack.c.l.b16 %v449
        %v505 = vunpack.c.l.b16 %v450
        %v506 = vunpack.c.l.b16 %v451
        %v507 = vunpack.c.l.b16 %v452
        %v508 = vunpack.c.l.b16 %v453
        %v509 = vunpack.c.l.b16 %v454
        %v510 = vunpack.c.l.b16 %v455
        %v511 = vunpack.c.l.b16 %v456
        %v512 = vpack.c.b16 %v505, %v504
        %v513 = vpack.c.b16 %v507, %v506
        %v514 = vpack.c.b16 %v509, %v508
        %v515 = vpack.c.b16 %v511, %v510
        %v536 = vunpack.c.l.b16 %v473
        %v537 = vunpack.c.l.b16 %v474
        %v538 = vunpack.c.l.b16 %v475
        %v539 = vunpack.c.l.b16 %v476
        %v540 = vunpack.c.l.b16 %v477
        %v541 = vunpack.c.l.b16 %v478
        %v542 = vunpack.c.l.b16 %v479
        %v543 = vunpack.c.l.b16 %v480
        %v544 = vunpack.c.l.b16 %v481
        %v545 = vunpack.c.l.b16 %v482
        %v546 = vunpack.c.l.b16 %v483
        %v547 = vunpack.c.l.b16 %v484
        %v548 = vunpack.c.l.b16 %v485
        %v549 = vunpack.c.l.b16 %v486
        %v550 = vunpack.c.l.b16 %v487
        %v551 = vunpack.c.l.b16 %v488
        %v552 = vpack.c.b16 %v537, %v536
        %v553 = vpack.c.b16 %v539, %v538
        %v554 = vpack.c.b16 %v541, %v540
        %v555 = vpack.c.b16 %v543, %v542
        %v556 = vpack.c.b16 %v545, %v544
        %v557 = vpack.c.b16 %v547, %v546
        %v558 = vpack.c.b16 %v549, %v548
        %v559 = vpack.c.b16 %v551, %v550
        %568 = vmatprep.subr.bf16.mxu0 0
        %569 = vmatpush1.bf16.msra.mxu0 %v559
        %570 = vmatprep.subr.bf16.mxu0 0
        %571 = vmatpush1.bf16.msra.mxu0 %v558
        %572 = vmatprep.subr.bf16.mxu0 0
        %573 = vmatpush1.bf16.msra.mxu0 %v557
        %574 = vmatprep.subr.bf16.mxu0 0
        %575 = vmatpush1.bf16.msra.mxu0 %v556
        %576 = vmatprep.subr.bf16.mxu0 0
        %577 = vmatpush1.bf16.msra.mxu0 %v555
        %578 = vmatprep.subr.bf16.mxu0 0
        %579 = vmatpush1.bf16.msra.mxu0 %v554
        %580 = vmatprep.subr.bf16.mxu0 0
        %581 = vmatpush1.bf16.msra.mxu0 %v553
        %582 = vmatprep.subr.bf16.mxu0 0
        %583 = vmatpush1.bf16.msra.mxu0 %v552
        %584 = vmatprep.subr.bf16.mxu0 0
        %585 = vmatpush2.bf16.msra.mxu0 0
        %586 = vmatprep.subr.bf16.mxu0 0
        %587 = vmatpush2.bf16.msra.mxu0 0
        %588 = vmatprep.subr.bf16.mxu0 0
        %589 = vmatpush2.bf16.msra.mxu0 0
        %590 = vmatprep.subr.bf16.mxu0 0
        %591 = vmatpush2.bf16.msra.mxu0 0
        %592 = vmatprep.subr.bf16.mxu0 0
        %593 = vmatpush2.bf16.msra.mxu0 0
        %594 = vmatprep.subr.bf16.mxu0 0
        %595 = vmatpush2.bf16.msra.mxu0 0
        %596 = vmatprep.subr.bf16.mxu0 0
        %597 = vmatpush2.bf16.msra.mxu0 0
        %598 = vmatprep.subr.bf16.mxu0 0
        %599 = vmatpush2.bf16.msra.mxu0 0
        %600 = vmatprep.mubr.bf16.mxu0 0
        %601 = vmatmul.mubr.bf16.gmra.mxu0 %v512
        %v602 = vpop.f32.mrf.mxu0
        %v603 = vadd.f32 %v494, %v602
        %v604 = vpop.f32.mrf.mxu0
        %v605 = vpop.f32.mrf.mxu0
        %v606 = vadd.f32 %v494, %v605
        %v607 = vpop.f32.mrf.mxu0
        %608 = vmatprep.mubr.bf16.mxu0 0
        %609 = vmatmul.mubr.bf16.gmra.mxu0 %v513
        %v610 = vpop.f32.mrf.mxu0
        %v611 = vadd.f32 %v494, %v610
        %v612 = vpop.f32.mrf.mxu0
        %v613 = vpop.f32.mrf.mxu0
        %v614 = vadd.f32 %v494, %v613
        %v615 = vpop.f32.mrf.mxu0
        %616 = vmatprep.mubr.bf16.mxu0 0
        %617 = vmatmul.mubr.bf16.gmra.mxu0 %v514
        %v618 = vpop.f32.mrf.mxu0
        %v619 = vadd.f32 %v494, %v618
        %v620 = vpop.f32.mrf.mxu0
        %v621 = vpop.f32.mrf.mxu0
        %v622 = vadd.f32 %v494, %v621
        %v623 = vpop.f32.mrf.mxu0
        %624 = vmatprep.mubr.bf16.mxu0 0
        %625 = vmatmul.mubr.bf16.gmra.mxu0 %v515
        %v626 = vpop.f32.mrf.mxu0
        %v627 = vadd.f32 %v494, %v626
        %v628 = vpop.f32.mrf.mxu0
        %v629 = vpop.f32.mrf.mxu0
        %v630 = vadd.f32 %v494, %v629
        %v631 = vpop.f32.mrf.mxu0
        %632 = vdwg.mxu0
        %v633 = vld [vmem:[%s435] sm:$0xf]
        %v634 = vld [vmem:[%s435 + $0x4] sm:$0xf]
        %v635 = vld [vmem:[%s435 + $0x8] sm:$0xf]
        %v636 = vld [vmem:[%s435 + $0xc] sm:$0xf]
        %v637 = vld [vmem:[%s435 + $0x10] sm:$0xf]
        %v638 = vld [vmem:[%s435 + $0x14] sm:$0xf]
        %v639 = vld [vmem:[%s435 + $0x18] sm:$0xf]
        %v640 = vld [vmem:[%s435 + $0x1c] sm:$0xf]
        %v641 = vld [vmem:[%s438] sm:$0x1]
        %v643 = vlaneseq
        %v644 = vshrl.u32 %v643, 7
        %v645 = vsub.s32 0, %v644
        %v646 = vrot.slane %v641, %v645
        %v664 = vunpack.c.l.b16 %v457
        %v665 = vunpack.c.l.b16 %v458
        %v666 = vunpack.c.l.b16 %v459
        %v667 = vunpack.c.l.b16 %v460
        %v668 = vunpack.c.l.b16 %v461
        %v669 = vunpack.c.l.b16 %v462
        %v670 = vunpack.c.l.b16 %v463
        %v671 = vunpack.c.l.b16 %v464
        %v672 = vunpack.c.l.b16 %v465
        %v673 = vunpack.c.l.b16 %v466
        %v674 = vunpack.c.l.b16 %v467
        %v675 = vunpack.c.l.b16 %v468
        %v676 = vunpack.c.l.b16 %v469
        %v677 = vunpack.c.l.b16 %v470
        %v678 = vunpack.c.l.b16 %v471
        %v679 = vunpack.c.l.b16 %v472
        %v680 = vpack.c.b16 %v665, %v664
        %v681 = vpack.c.b16 %v667, %v666
        %v682 = vpack.c.b16 %v669, %v668
        %v683 = vpack.c.b16 %v671, %v670
        %v684 = vpack.c.b16 %v673, %v672
        %v685 = vpack.c.b16 %v675, %v674
        %v686 = vpack.c.b16 %v677, %v676
        %v687 = vpack.c.b16 %v679, %v678
        %v696 = vunpack.c.l.b16 %v633
        %v697 = vunpack.c.l.b16 %v634
        %v698 = vunpack.c.l.b16 %v635
        %v699 = vunpack.c.l.b16 %v636
        %v700 = vunpack.c.l.b16 %v637
        %v701 = vunpack.c.l.b16 %v638
        %v702 = vunpack.c.l.b16 %v639
        %v703 = vunpack.c.l.b16 %v640
        %v704 = vpack.c.b16 %v697, %v696
        %v705 = vpack.c.b16 %v699, %v698
        %v706 = vpack.c.b16 %v701, %v700
        %v707 = vpack.c.b16 %v703, %v702
        %vm712 = vcmask 523264
        %v714 = vsel %vm712, %v680, 0
        %v717 = vsel %vm712, %v681, 0
        %v720 = vsel %vm712, %v682, 0
        %v723 = vsel %vm712, %v683, 0
        %v726 = vsel %vm712, %v684, 0
        %v729 = vsel %vm712, %v685, 0
        %v732 = vsel %vm712, %v686, 0
        %v735 = vsel %vm712, %v687, 0
        %737 = vmatprep.subr.bf16.mxu0 0
        %738 = vmatpush1.bf16.msra.mxu0 0
        %739 = vmatprep.subr.bf16.mxu0 0
        %740 = vmatpush1.bf16.msra.mxu0 0
        %741 = vmatprep.subr.bf16.mxu0 0
        %742 = vmatpush1.bf16.msra.mxu0 0
        %743 = vmatprep.subr.bf16.mxu0 0
        %744 = vmatpush1.bf16.msra.mxu0 0
        %745 = vmatprep.subr.bf16.mxu0 0
        %746 = vmatpush1.bf16.msra.mxu0 %v707
        %747 = vmatprep.subr.bf16.mxu0 0
        %748 = vmatpush1.bf16.msra.mxu0 %v706
        %749 = vmatprep.subr.bf16.mxu0 0
        %750 = vmatpush1.bf16.msra.mxu0 %v705
        %751 = vmatprep.subr.bf16.mxu0 0
        %752 = vmatpush1.bf16.msra.mxu0 %v704
        %753 = vmatprep.subr.bf16.mxu0 0
        %754 = vmatpush2.bf16.msra.mxu0 0
        %755 = vmatprep.subr.bf16.mxu0 0
        %756 = vmatpush2.bf16.msra.mxu0 0
        %757 = vmatprep.subr.bf16.mxu0 0
        %758 = vmatpush2.bf16.msra.mxu0 0
        %759 = vmatprep.subr.bf16.mxu0 0
        %760 = vmatpush2.bf16.msra.mxu0 0
        %761 = vmatprep.subr.bf16.mxu0 0
        %762 = vmatpush2.bf16.msra.mxu0 0
        %763 = vmatprep.subr.bf16.mxu0 0
        %764 = vmatpush2.bf16.msra.mxu0 0
        %765 = vmatprep.subr.bf16.mxu0 0
        %766 = vmatpush2.bf16.msra.mxu0 0
        %767 = vmatprep.subr.bf16.mxu0 0
        %768 = vmatpush2.bf16.msra.mxu0 0
        %769 = vmatprep.mubr.bf16.mxu0 0
        %770 = vmatmul.mubr.bf16.gmra.mxu0 %v714
        %v771 = vpop.f32.mrf.mxu0
        %v772 = vadd.f32 %v646, %v771
        %v773 = vpop.f32.mrf.mxu0
        %v774 = vpop.f32.mrf.mxu0
        %v775 = vadd.f32 %v646, %v774
        %v776 = vpop.f32.mrf.mxu0
        %777 = vmatprep.mubr.bf16.mxu0 0
        %778 = vmatmul.mubr.bf16.gmra.mxu0 %v717
        %v779 = vpop.f32.mrf.mxu0
        %v780 = vadd.f32 %v646, %v779
        %v781 = vpop.f32.mrf.mxu0
        %v782 = vpop.f32.mrf.mxu0
        %v783 = vadd.f32 %v646, %v782
        %v784 = vpop.f32.mrf.mxu0
        %785 = vmatprep.mubr.bf16.mxu0 0
        %786 = vmatmul.mubr.bf16.gmra.mxu0 %v720
        %v787 = vpop.f32.mrf.mxu0
        %v788 = vadd.f32 %v646, %v787
        %v789 = vpop.f32.mrf.mxu0
        %v790 = vpop.f32.mrf.mxu0
        %v791 = vadd.f32 %v646, %v790
        %v792 = vpop.f32.mrf.mxu0
        %793 = vmatprep.mubr.bf16.mxu0 0
        %794 = vmatmul.mubr.bf16.gmra.mxu0 %v723
        %v795 = vpop.f32.mrf.mxu0
        %v796 = vadd.f32 %v646, %v795
        %v797 = vpop.f32.mrf.mxu0
        %v798 = vpop.f32.mrf.mxu0
        %v799 = vadd.f32 %v646, %v798
        %v800 = vpop.f32.mrf.mxu0
        %801 = vmatprep.mubr.bf16.mxu0 0
        %802 = vmatmul.mubr.bf16.gmra.mxu0 %v726
        %v803 = vpop.f32.mrf.mxu0
        %v804 = vadd.f32 %v646, %v803
        %v805 = vpop.f32.mrf.mxu0
        %v806 = vpop.f32.mrf.mxu0
        %v807 = vadd.f32 %v646, %v806
        %v808 = vpop.f32.mrf.mxu0
        %809 = vmatprep.mubr.bf16.mxu0 0
        %810 = vmatmul.mubr.bf16.gmra.mxu0 %v729
        %v811 = vpop.f32.mrf.mxu0
        %v812 = vadd.f32 %v646, %v811
        %v813 = vpop.f32.mrf.mxu0
        %v814 = vpop.f32.mrf.mxu0
        %v815 = vadd.f32 %v646, %v814
        %v816 = vpop.f32.mrf.mxu0
        %817 = vmatprep.mubr.bf16.mxu0 0
        %818 = vmatmul.mubr.bf16.gmra.mxu0 %v732
        %v819 = vpop.f32.mrf.mxu0
        %v820 = vadd.f32 %v646, %v819
        %v821 = vpop.f32.mrf.mxu0
        %v822 = vpop.f32.mrf.mxu0
        %v823 = vadd.f32 %v646, %v822
        %v824 = vpop.f32.mrf.mxu0
        %825 = vmatprep.mubr.bf16.mxu0 0
        %826 = vmatmul.mubr.bf16.gmra.mxu0 %v735
        %v827 = vpop.f32.mrf.mxu0
        %v828 = vadd.f32 %v646, %v827
        %v829 = vpop.f32.mrf.mxu0
        %v830 = vpop.f32.mrf.mxu0
        %v831 = vadd.f32 %v646, %v830
        %v832 = vpop.f32.mrf.mxu0
        %833 = vdwg.mxu0
        %v834 = vld [vmem:[%s443] sm:$0xf]
        %v835 = vld [vmem:[%s443 + $0x4] sm:$0xf]
        %v836 = vld [vmem:[%s443 + $0x8] sm:$0xf]
        %v837 = vld [vmem:[%s443 + $0xc] sm:$0xf]
        %v838 = vld [vmem:[%s443 + $0x10] sm:$0xf]
        %v839 = vld [vmem:[%s443 + $0x14] sm:$0xf]
        %v840 = vld [vmem:[%s443 + $0x18] sm:$0xf]
        %v841 = vld [vmem:[%s443 + $0x1c] sm:$0xf]
        %v842 = vld [vmem:[%s446] sm:$0x1]
        %v844 = vlaneseq
        %v845 = vshrl.u32 %v844, 7
        %v846 = vsub.s32 0, %v845
        %v847 = vrot.slane %v842, %v846
        %v857 = vunpack.c.l.b16 %v834
        %v858 = vunpack.c.l.b16 %v835
        %v859 = vunpack.c.l.b16 %v836
        %v860 = vunpack.c.l.b16 %v837
        %v861 = vunpack.c.l.b16 %v838
        %v862 = vunpack.c.l.b16 %v839
        %v863 = vunpack.c.l.b16 %v840
        %v864 = vunpack.c.l.b16 %v841
        %v865 = vpack.c.b16 %v858, %v857
        %v866 = vpack.c.b16 %v860, %v859
        %v867 = vpack.c.b16 %v862, %v861
        %v868 = vpack.c.b16 %v864, %v863
        %873 = vmatprep.subr.bf16.mxu0 0
        %874 = vmatpush1.bf16.msra.mxu0 0
        %875 = vmatprep.subr.bf16.mxu0 0
        %876 = vmatpush1.bf16.msra.mxu0 0
        %877 = vmatprep.subr.bf16.mxu0 0
        %878 = vmatpush1.bf16.msra.mxu0 0
        %879 = vmatprep.subr.bf16.mxu0 0
        %880 = vmatpush1.bf16.msra.mxu0 0
        %881 = vmatprep.subr.bf16.mxu0 0
        %882 = vmatpush1.bf16.msra.mxu0 %v868
        %883 = vmatprep.subr.bf16.mxu0 0
        %884 = vmatpush1.bf16.msra.mxu0 %v867
        %885 = vmatprep.subr.bf16.mxu0 0
        %886 = vmatpush1.bf16.msra.mxu0 %v866
        %887 = vmatprep.subr.bf16.mxu0 0
        %888 = vmatpush1.bf16.msra.mxu0 %v865
        %889 = vmatprep.subr.bf16.mxu0 0
        %890 = vmatpush2.bf16.msra.mxu0 0
        %891 = vmatprep.subr.bf16.mxu0 0
        %892 = vmatpush2.bf16.msra.mxu0 0
        %893 = vmatprep.subr.bf16.mxu0 0
        %894 = vmatpush2.bf16.msra.mxu0 0
        %895 = vmatprep.subr.bf16.mxu0 0
        %896 = vmatpush2.bf16.msra.mxu0 0
        %897 = vmatprep.subr.bf16.mxu0 0
        %898 = vmatpush2.bf16.msra.mxu0 0
        %899 = vmatprep.subr.bf16.mxu0 0
        %900 = vmatpush2.bf16.msra.mxu0 0
        %901 = vmatprep.subr.bf16.mxu0 0
        %902 = vmatpush2.bf16.msra.mxu0 0
        %903 = vmatprep.subr.bf16.mxu0 0
        %904 = vmatpush2.bf16.msra.mxu0 0
        %905 = vmatprep.mubr.bf16.mxu0 0
        %906 = vmatmul.mubr.bf16.gmra.mxu0 %v714
        %v907 = vpop.f32.mrf.mxu0
        %v908 = vadd.f32 %v847, %v907
        %v909 = vpop.f32.mrf.mxu0
        %v910 = vpop.f32.mrf.mxu0
        %v911 = vadd.f32 %v847, %v910
        %v912 = vpop.f32.mrf.mxu0
        %913 = vmatprep.mubr.bf16.mxu0 0
        %914 = vmatmul.mubr.bf16.gmra.mxu0 %v717
        %v915 = vpop.f32.mrf.mxu0
        %v916 = vadd.f32 %v847, %v915
        %v917 = vpop.f32.mrf.mxu0
        %v918 = vpop.f32.mrf.mxu0
        %v919 = vadd.f32 %v847, %v918
        %v920 = vpop.f32.mrf.mxu0
        %921 = vmatprep.mubr.bf16.mxu0 0
        %922 = vmatmul.mubr.bf16.gmra.mxu0 %v720
        %v923 = vpop.f32.mrf.mxu0
        %v924 = vadd.f32 %v847, %v923
        %v925 = vpop.f32.mrf.mxu0
        %v926 = vpop.f32.mrf.mxu0
        %v927 = vadd.f32 %v847, %v926
        %v928 = vpop.f32.mrf.mxu0
        %929 = vmatprep.mubr.bf16.mxu0 0
        %930 = vmatmul.mubr.bf16.gmra.mxu0 %v723
        %v931 = vpop.f32.mrf.mxu0
        %v932 = vadd.f32 %v847, %v931
        %v933 = vpop.f32.mrf.mxu0
        %v934 = vpop.f32.mrf.mxu0
        %v935 = vadd.f32 %v847, %v934
        %v936 = vpop.f32.mrf.mxu0
        %937 = vmatprep.mubr.bf16.mxu0 0
        %938 = vmatmul.mubr.bf16.gmra.mxu0 %v726
        %v939 = vpop.f32.mrf.mxu0
        %v940 = vadd.f32 %v847, %v939
        %v941 = vpop.f32.mrf.mxu0
        %v942 = vpop.f32.mrf.mxu0
        %v943 = vadd.f32 %v847, %v942
        %v944 = vpop.f32.mrf.mxu0
        %945 = vmatprep.mubr.bf16.mxu0 0
        %946 = vmatmul.mubr.bf16.gmra.mxu0 %v729
        %v947 = vpop.f32.mrf.mxu0
        %v948 = vadd.f32 %v847, %v947
        %v949 = vpop.f32.mrf.mxu0
        %v950 = vpop.f32.mrf.mxu0
        %v951 = vadd.f32 %v847, %v950
        %v952 = vpop.f32.mrf.mxu0
        %953 = vmatprep.mubr.bf16.mxu0 0
        %954 = vmatmul.mubr.bf16.gmra.mxu0 %v732
        %v955 = vpop.f32.mrf.mxu0
        %v956 = vadd.f32 %v847, %v955
        %v957 = vpop.f32.mrf.mxu0
        %v958 = vpop.f32.mrf.mxu0
        %v959 = vadd.f32 %v847, %v958
        %v960 = vpop.f32.mrf.mxu0
        %961 = vmatprep.mubr.bf16.mxu0 0
        %962 = vmatmul.mubr.bf16.gmra.mxu0 %v735
        %v963 = vpop.f32.mrf.mxu0
        %v964 = vadd.f32 %v847, %v963
        %v965 = vpop.f32.mrf.mxu0
        %v966 = vpop.f32.mrf.mxu0
        %v967 = vadd.f32 %v847, %v966
        %v968 = vpop.f32.mrf.mxu0
        %969 = vdwg.mxu0
        %v970 = vpack.c.bf16 %v603, %v603
        %v971 = vpack.c.bf16 %v606, %v606
        %v972 = vpack.c.bf16 %v611, %v611
        %v973 = vpack.c.bf16 %v614, %v614
        %v974 = vpack.c.bf16 %v619, %v619
        %v975 = vpack.c.bf16 %v622, %v622
        %v976 = vpack.c.bf16 %v627, %v627
        %v977 = vpack.c.bf16 %v630, %v630
        %v978 = vpack.c.bf16 %v775, %v772
        %v979 = vpack.c.bf16 %v783, %v780
        %v980 = vpack.c.bf16 %v791, %v788
        %v981 = vpack.c.bf16 %v799, %v796
        %v982 = vpack.c.bf16 %v807, %v804
        %v983 = vpack.c.bf16 %v815, %v812
        %v984 = vpack.c.bf16 %v823, %v820
        %v985 = vpack.c.bf16 %v831, %v828
        %v986 = vpack.c.bf16 %v911, %v908
        %v987 = vpack.c.bf16 %v919, %v916
        %v988 = vpack.c.bf16 %v927, %v924
        %v989 = vpack.c.bf16 %v935, %v932
        %v990 = vpack.c.bf16 %v943, %v940
        %v991 = vpack.c.bf16 %v951, %v948
        %v992 = vpack.c.bf16 %v959, %v956
        %v993 = vpack.c.bf16 %v967, %v964
        %vm994 = vcmask 261120
        %v996 = vsel %vm994, %v970, 0
        %v999 = vsel %vm994, %v978, 0
        %1001 = vmatprep.subr.bf16.mxu0 0
        %1002 = vmatpush1.bf16.xpose.msra.mxu0 0
        %1003 = vmatprep.subr.bf16.mxu0 0
        %1004 = vmatpush1.bf16.xpose.msra.mxu0 0
        %1005 = vmatprep.subr.bf16.mxu0 0
        %1006 = vmatpush1.bf16.xpose.msra.mxu0 0
        %1007 = vmatprep.subr.bf16.mxu0 0
        %1008 = vmatpush1.bf16.xpose.msra.mxu0 0
        %1009 = vmatprep.subr.bf16.mxu0 0
        %1010 = vmatpush1.bf16.xpose.msra.mxu0 0
        %1011 = vmatprep.subr.bf16.mxu0 0
        %1012 = vmatpush1.bf16.xpose.msra.mxu0 0
        %1013 = vmatprep.subr.bf16.mxu0 0
        %1014 = vmatpush1.bf16.xpose.msra.mxu0 0
        %1015 = vmatprep.subr.bf16.mxu0 0
        %1016 = vmatpush1.bf16.xpose.msra.mxu0 %v999
        %1017 = vmatprep.subr.bf16.mxu0 0
        %1018 = vmatpush2.bf16.xpose.msra.mxu0 0
        %1019 = vmatprep.subr.bf16.mxu0 0
        %1020 = vmatpush2.bf16.xpose.msra.mxu0 0
        %1021 = vmatprep.subr.bf16.mxu0 0
        %1022 = vmatpush2.bf16.xpose.msra.mxu0 0
        %1023 = vmatprep.subr.bf16.mxu0 0
        %1024 = vmatpush2.bf16.xpose.msra.mxu0 0
        %1025 = vmatprep.subr.bf16.mxu0 0
        %1026 = vmatpush2.bf16.xpose.msra.mxu0 0
        %1027 = vmatprep.subr.bf16.mxu0 0
        %1028 = vmatpush2.bf16.xpose.msra.mxu0 0
        %1029 = vmatprep.subr.bf16.mxu0 0
        %1030 = vmatpush2.bf16.xpose.msra.mxu0 0
        %1031 = vmatprep.subr.bf16.mxu0 0
        %1032 = vmatpush2.bf16.xpose.msra.mxu0 0
        %1033 = vmatprep.mubr.bf16.mxu0 0
        %1034 = vmatmul.mubr.bf16.gmra.mxu0 %v996
        %v1035 = vpop.f32.mrf.mxu0
        %v1036 = vadd.f32 0.0, %v1035
        %v1037 = vpop.f32.mrf.mxu0
        %v1038 = vpop.f32.mrf.mxu0
        %v1039 = vpop.f32.mrf.mxu0
        %1040 = vdwg.mxu0
        %v1042 = vsel %vm994, %v971, 0
        %v1045 = vsel %vm994, %v979, 0
        %1047 = vmatprep.subr.bf16.mxu0 0
        %1048 = vmatpush1.bf16.xpose.msra.mxu0 0
        %1049 = vmatprep.subr.bf16.mxu0 0
        %1050 = vmatpush1.bf16.xpose.msra.mxu0 0
        %1051 = vmatprep.subr.bf16.mxu0 0
        %1052 = vmatpush1.bf16.xpose.msra.mxu0 0
        %1053 = vmatprep.subr.bf16.mxu0 0
        %1054 = vmatpush1.bf16.xpose.msra.mxu0 0
        %1055 = vmatprep.subr.bf16.mxu0 0
        %1056 = vmatpush1.bf16.xpose.msra.mxu0 0
        %1057 = vmatprep.subr.bf16.mxu0 0
        %1058 = vmatpush1.bf16.xpose.msra.mxu0 0
        %1059 = vmatprep.subr.bf16.mxu0 0
        %1060 = vmatpush1.bf16.xpose.msra.mxu0 0
        %1061 = vmatprep.subr.bf16.mxu0 0
        %1062 = vmatpush1.bf16.xpose.msra.mxu0 %v1045
        %1063 = vmatprep.subr.bf16.mxu0 0
        %1064 = vmatpush2.bf16.xpose.msra.mxu0 0
        %1065 = vmatprep.subr.bf16.mxu0 0
        %1066 = vmatpush2.bf16.xpose.msra.mxu0 0
        %1067 = vmatprep.subr.bf16.mxu0 0
        %1068 = vmatpush2.bf16.xpose.msra.mxu0 0
        %1069 = vmatprep.subr.bf16.mxu0 0
        %1070 = vmatpush2.bf16.xpose.msra.mxu0 0
        %1071 = vmatprep.subr.bf16.mxu0 0
        %1072 = vmatpush2.bf16.xpose.msra.mxu0 0
        %1073 = vmatprep.subr.bf16.mxu0 0
        %1074 = vmatpush2.bf16.xpose.msra.mxu0 0
        %1075 = vmatprep.subr.bf16.mxu0 0
        %1076 = vmatpush2.bf16.xpose.msra.mxu0 0
        %1077 = vmatprep.subr.bf16.mxu0 0
        %1078 = vmatpush2.bf16.xpose.msra.mxu0 0
        %1079 = vmatprep.mubr.bf16.mxu0 0
        %1080 = vmatmul.mubr.bf16.gmra.mxu0 %v1042
        %v1081 = vpop.f32.mrf.mxu0
        %v1082 = vadd.f32 0.0, %v1081
        %v1083 = vpop.f32.mrf.mxu0
        %v1084 = vpop.f32.mrf.mxu0
        %v1085 = vpop.f32.mrf.mxu0
        %1086 = vdwg.mxu0
        %v1088 = vsel %vm994, %v972, 0
        %v1091 = vsel %vm994, %v980, 0
        %1093 = vmatprep.subr.bf16.mxu0 0
        %1094 = vmatpush1.bf16.xpose.msra.mxu0 0
        %1095 = vmatprep.subr.bf16.mxu0 0
        %1096 = vmatpush1.bf16.xpose.msra.mxu0 0
        %1097 = vmatprep.subr.bf16.mxu0 0
        %1098 = vmatpush1.bf16.xpose.msra.mxu0 0
        %1099 = vmatprep.subr.bf16.mxu0 0
        %1100 = vmatpush1.bf16.xpose.msra.mxu0 0
        %1101 = vmatprep.subr.bf16.mxu0 0
        %1102 = vmatpush1.bf16.xpose.msra.mxu0 0
        %1103 = vmatprep.subr.bf16.mxu0 0
        %1104 = vmatpush1.bf16.xpose.msra.mxu0 0
        %1105 = vmatprep.subr.bf16.mxu0 0
        %1106 = vmatpush1.bf16.xpose.msra.mxu0 0
        %1107 = vmatprep.subr.bf16.mxu0 0
        %1108 = vmatpush1.bf16.xpose.msra.mxu0 %v1091
        %1109 = vmatprep.subr.bf16.mxu0 0
        %1110 = vmatpush2.bf16.xpose.msra.mxu0 0
        %1111 = vmatprep.subr.bf16.mxu0 0
        %1112 = vmatpush2.bf16.xpose.msra.mxu0 0
        %1113 = vmatprep.subr.bf16.mxu0 0
        %1114 = vmatpush2.bf16.xpose.msra.mxu0 0
        %1115 = vmatprep.subr.bf16.mxu0 0
        %1116 = vmatpush2.bf16.xpose.msra.mxu0 0
        %1117 = vmatprep.subr.bf16.mxu0 0
        %1118 = vmatpush2.bf16.xpose.msra.mxu0 0
        %1119 = vmatprep.subr.bf16.mxu0 0
        %1120 = vmatpush2.bf16.xpose.msra.mxu0 0
        %1121 = vmatprep.subr.bf16.mxu0 0
        %1122 = vmatpush2.bf16.xpose.msra.mxu0 0
        %1123 = vmatprep.subr.bf16.mxu0 0
        %1124 = vmatpush2.bf16.xpose.msra.mxu0 0
        %1125 = vmatprep.mubr.bf16.mxu0 0
        %1126 = vmatmul.mubr.bf16.gmra.mxu0 %v1088
        %v1127 = vpop.f32.mrf.mxu0
        %v1128 = vadd.f32 0.0, %v1127
        %v1129 = vpop.f32.mrf.mxu0
        %v1130 = vpop.f32.mrf.mxu0
        %v1131 = vpop.f32.mrf.mxu0
        %1132 = vdwg.mxu0
        %v1134 = vsel %vm994, %v973, 0
        %v1137 = vsel %vm994, %v981, 0
        %1139 = vmatprep.subr.bf16.mxu0 0
        %1140 = vmatpush1.bf16.xpose.msra.mxu0 0
        %1141 = vmatprep.subr.bf16.mxu0 0
        %1142 = vmatpush1.bf16.xpose.msra.mxu0 0
        %1143 = vmatprep.subr.bf16.mxu0 0
        %1144 = vmatpush1.bf16.xpose.msra.mxu0 0
        %1145 = vmatprep.subr.bf16.mxu0 0
        %1146 = vmatpush1.bf16.xpose.msra.mxu0 0
        %1147 = vmatprep.subr.bf16.mxu0 0
        %1148 = vmatpush1.bf16.xpose.msra.mxu0 0
        %1149 = vmatprep.subr.bf16.mxu0 0
        %1150 = vmatpush1.bf16.xpose.msra.mxu0 0
        %1151 = vmatprep.subr.bf16.mxu0 0
        %1152 = vmatpush1.bf16.xpose.msra.mxu0 0
        %1153 = vmatprep.subr.bf16.mxu0 0
        %1154 = vmatpush1.bf16.xpose.msra.mxu0 %v1137
        %1155 = vmatprep.subr.bf16.mxu0 0
        %1156 = vmatpush2.bf16.xpose.msra.mxu0 0
        %1157 = vmatprep.subr.bf16.mxu0 0
        %1158 = vmatpush2.bf16.xpose.msra.mxu0 0
        %1159 = vmatprep.subr.bf16.mxu0 0
        %1160 = vmatpush2.bf16.xpose.msra.mxu0 0
        %1161 = vmatprep.subr.bf16.mxu0 0
        %1162 = vmatpush2.bf16.xpose.msra.mxu0 0
        %1163 = vmatprep.subr.bf16.mxu0 0
        %1164 = vmatpush2.bf16.xpose.msra.mxu0 0
        %1165 = vmatprep.subr.bf16.mxu0 0
        %1166 = vmatpush2.bf16.xpose.msra.mxu0 0
        %1167 = vmatprep.subr.bf16.mxu0 0
        %1168 = vmatpush2.bf16.xpose.msra.mxu0 0
        %1169 = vmatprep.subr.bf16.mxu0 0
        %1170 = vmatpush2.bf16.xpose.msra.mxu0 0
        %1171 = vmatprep.mubr.bf16.mxu0 0
        %1172 = vmatmul.mubr.bf16.gmra.mxu0 %v1134
        %v1173 = vpop.f32.mrf.mxu0
        %v1174 = vadd.f32 0.0, %v1173
        %v1175 = vpop.f32.mrf.mxu0
        %v1176 = vpop.f32.mrf.mxu0
        %v1177 = vpop.f32.mrf.mxu0
        %1178 = vdwg.mxu0
        %v1180 = vsel %vm994, %v974, 0
        %v1183 = vsel %vm994, %v982, 0
        %1185 = vmatprep.subr.bf16.mxu0 0
        %1186 = vmatpush1.bf16.xpose.msra.mxu0 0
        %1187 = vmatprep.subr.bf16.mxu0 0
        %1188 = vmatpush1.bf16.xpose.msra.mxu0 0
        %1189 = vmatprep.subr.bf16.mxu0 0
        %1190 = vmatpush1.bf16.xpose.msra.mxu0 0
        %1191 = vmatprep.subr.bf16.mxu0 0
        %1192 = vmatpush1.bf16.xpose.msra.mxu0 0
        %1193 = vmatprep.subr.bf16.mxu0 0
        %1194 = vmatpush1.bf16.xpose.msra.mxu0 0
        %1195 = vmatprep.subr.bf16.mxu0 0
        %1196 = vmatpush1.bf16.xpose.msra.mxu0 0
        %1197 = vmatprep.subr.bf16.mxu0 0
        %1198 = vmatpush1.bf16.xpose.msra.mxu0 0
        %1199 = vmatprep.subr.bf16.mxu0 0
        %1200 = vmatpush1.bf16.xpose.msra.mxu0 %v1183
        %1201 = vmatprep.subr.bf16.mxu0 0
        %1202 = vmatpush2.bf16.xpose.msra.mxu0 0
        %1203 = vmatprep.subr.bf16.mxu0 0
        %1204 = vmatpush2.bf16.xpose.msra.mxu0 0
        %1205 = vmatprep.subr.bf16.mxu0 0
        %1206 = vmatpush2.bf16.xpose.msra.mxu0 0
        %1207 = vmatprep.subr.bf16.mxu0 0
        %1208 = vmatpush2.bf16.xpose.msra.mxu0 0
        %1209 = vmatprep.subr.bf16.mxu0 0
        %1210 = vmatpush2.bf16.xpose.msra.mxu0 0
        %1211 = vmatprep.subr.bf16.mxu0 0
        %1212 = vmatpush2.bf16.xpose.msra.mxu0 0
        %1213 = vmatprep.subr.bf16.mxu0 0
        %1214 = vmatpush2.bf16.xpose.msra.mxu0 0
        %1215 = vmatprep.subr.bf16.mxu0 0
        %1216 = vmatpush2.bf16.xpose.msra.mxu0 0
        %1217 = vmatprep.mubr.bf16.mxu0 0
        %1218 = vmatmul.mubr.bf16.gmra.mxu0 %v1180
        %v1219 = vpop.f32.mrf.mxu0
        %v1220 = vadd.f32 0.0, %v1219
        %v1221 = vpop.f32.mrf.mxu0
        %v1222 = vpop.f32.mrf.mxu0
        %v1223 = vpop.f32.mrf.mxu0
        %1224 = vdwg.mxu0
        %v1226 = vsel %vm994, %v975, 0
        %v1229 = vsel %vm994, %v983, 0
        %1231 = vmatprep.subr.bf16.mxu0 0
        %1232 = vmatpush1.bf16.xpose.msra.mxu0 0
        %1233 = vmatprep.subr.bf16.mxu0 0
        %1234 = vmatpush1.bf16.xpose.msra.mxu0 0
        %1235 = vmatprep.subr.bf16.mxu0 0
        %1236 = vmatpush1.bf16.xpose.msra.mxu0 0
        %1237 = vmatprep.subr.bf16.mxu0 0
        %1238 = vmatpush1.bf16.xpose.msra.mxu0 0
        %1239 = vmatprep.subr.bf16.mxu0 0
        %1240 = vmatpush1.bf16.xpose.msra.mxu0 0
        %1241 = vmatprep.subr.bf16.mxu0 0
        %1242 = vmatpush1.bf16.xpose.msra.mxu0 0
        %1243 = vmatprep.subr.bf16.mxu0 0
        %1244 = vmatpush1.bf16.xpose.msra.mxu0 0
        %1245 = vmatprep.subr.bf16.mxu0 0
        %1246 = vmatpush1.bf16.xpose.msra.mxu0 %v1229
        %1247 = vmatprep.subr.bf16.mxu0 0
        %1248 = vmatpush2.bf16.xpose.msra.mxu0 0
        %1249 = vmatprep.subr.bf16.mxu0 0
        %1250 = vmatpush2.bf16.xpose.msra.mxu0 0
        %1251 = vmatprep.subr.bf16.mxu0 0
        %1252 = vmatpush2.bf16.xpose.msra.mxu0 0
        %1253 = vmatprep.subr.bf16.mxu0 0
        %1254 = vmatpush2.bf16.xpose.msra.mxu0 0
        %1255 = vmatprep.subr.bf16.mxu0 0
        %1256 = vmatpush2.bf16.xpose.msra.mxu0 0
        %1257 = vmatprep.subr.bf16.mxu0 0
        %1258 = vmatpush2.bf16.xpose.msra.mxu0 0
        %1259 = vmatprep.subr.bf16.mxu0 0
        %1260 = vmatpush2.bf16.xpose.msra.mxu0 0
        %1261 = vmatprep.subr.bf16.mxu0 0
        %1262 = vmatpush2.bf16.xpose.msra.mxu0 0
        %1263 = vmatprep.mubr.bf16.mxu0 0
        %1264 = vmatmul.mubr.bf16.gmra.mxu0 %v1226
        %v1265 = vpop.f32.mrf.mxu0
        %v1266 = vadd.f32 0.0, %v1265
        %v1267 = vpop.f32.mrf.mxu0
        %v1268 = vpop.f32.mrf.mxu0
        %v1269 = vpop.f32.mrf.mxu0
        %1270 = vdwg.mxu0
        %v1272 = vsel %vm994, %v976, 0
        %v1275 = vsel %vm994, %v984, 0
        %1277 = vmatprep.subr.bf16.mxu0 0
        %1278 = vmatpush1.bf16.xpose.msra.mxu0 0
        %1279 = vmatprep.subr.bf16.mxu0 0
        %1280 = vmatpush1.bf16.xpose.msra.mxu0 0
        %1281 = vmatprep.subr.bf16.mxu0 0
        %1282 = vmatpush1.bf16.xpose.msra.mxu0 0
        %1283 = vmatprep.subr.bf16.mxu0 0
        %1284 = vmatpush1.bf16.xpose.msra.mxu0 0
        %1285 = vmatprep.subr.bf16.mxu0 0
        %1286 = vmatpush1.bf16.xpose.msra.mxu0 0
        %1287 = vmatprep.subr.bf16.mxu0 0
        %1288 = vmatpush1.bf16.xpose.msra.mxu0 0
        %1289 = vmatprep.subr.bf16.mxu0 0
        %1290 = vmatpush1.bf16.xpose.msra.mxu0 0
        %1291 = vmatprep.subr.bf16.mxu0 0
        %1292 = vmatpush1.bf16.xpose.msra.mxu0 %v1275
        %1293 = vmatprep.subr.bf16.mxu0 0
        %1294 = vmatpush2.bf16.xpose.msra.mxu0 0
        %1295 = vmatprep.subr.bf16.mxu0 0
        %1296 = vmatpush2.bf16.xpose.msra.mxu0 0
        %1297 = vmatprep.subr.bf16.mxu0 0
        %1298 = vmatpush2.bf16.xpose.msra.mxu0 0
        %1299 = vmatprep.subr.bf16.mxu0 0
        %1300 = vmatpush2.bf16.xpose.msra.mxu0 0
        %1301 = vmatprep.subr.bf16.mxu0 0
        %1302 = vmatpush2.bf16.xpose.msra.mxu0 0
        %1303 = vmatprep.subr.bf16.mxu0 0
        %1304 = vmatpush2.bf16.xpose.msra.mxu0 0
        %1305 = vmatprep.subr.bf16.mxu0 0
        %1306 = vmatpush2.bf16.xpose.msra.mxu0 0
        %1307 = vmatprep.subr.bf16.mxu0 0
        %1308 = vmatpush2.bf16.xpose.msra.mxu0 0
        %1309 = vmatprep.mubr.bf16.mxu0 0
        %1310 = vmatmul.mubr.bf16.gmra.mxu0 %v1272
        %v1311 = vpop.f32.mrf.mxu0
        %v1312 = vadd.f32 0.0, %v1311
        %v1313 = vpop.f32.mrf.mxu0
        %v1314 = vpop.f32.mrf.mxu0
        %v1315 = vpop.f32.mrf.mxu0
        %1316 = vdwg.mxu0
        %v1318 = vsel %vm994, %v977, 0
        %v1321 = vsel %vm994, %v985, 0
        %1323 = vmatprep.subr.bf16.mxu0 0
        %1324 = vmatpush1.bf16.xpose.msra.mxu0 0
        %1325 = vmatprep.subr.bf16.mxu0 0
        %1326 = vmatpush1.bf16.xpose.msra.mxu0 0
        %1327 = vmatprep.subr.bf16.mxu0 0
        %1328 = vmatpush1.bf16.xpose.msra.mxu0 0
        %1329 = vmatprep.subr.bf16.mxu0 0
        %1330 = vmatpush1.bf16.xpose.msra.mxu0 0
        %1331 = vmatprep.subr.bf16.mxu0 0
        %1332 = vmatpush1.bf16.xpose.msra.mxu0 0
        %1333 = vmatprep.subr.bf16.mxu0 0
        %1334 = vmatpush1.bf16.xpose.msra.mxu0 0
        %1335 = vmatprep.subr.bf16.mxu0 0
        %1336 = vmatpush1.bf16.xpose.msra.mxu0 0
        %1337 = vmatprep.subr.bf16.mxu0 0
        %1338 = vmatpush1.bf16.xpose.msra.mxu0 %v1321
        %1339 = vmatprep.subr.bf16.mxu0 0
        %1340 = vmatpush2.bf16.xpose.msra.mxu0 0
        %1341 = vmatprep.subr.bf16.mxu0 0
        %1342 = vmatpush2.bf16.xpose.msra.mxu0 0
        %1343 = vmatprep.subr.bf16.mxu0 0
        %1344 = vmatpush2.bf16.xpose.msra.mxu0 0
        %1345 = vmatprep.subr.bf16.mxu0 0
        %1346 = vmatpush2.bf16.xpose.msra.mxu0 0
        %1347 = vmatprep.subr.bf16.mxu0 0
        %1348 = vmatpush2.bf16.xpose.msra.mxu0 0
        %1349 = vmatprep.subr.bf16.mxu0 0
        %1350 = vmatpush2.bf16.xpose.msra.mxu0 0
        %1351 = vmatprep.subr.bf16.mxu0 0
        %1352 = vmatpush2.bf16.xpose.msra.mxu0 0
        %1353 = vmatprep.subr.bf16.mxu0 0
        %1354 = vmatpush2.bf16.xpose.msra.mxu0 0
        %1355 = vmatprep.mubr.bf16.mxu0 0
        %1356 = vmatmul.mubr.bf16.gmra.mxu0 %v1318
        %v1357 = vpop.f32.mrf.mxu0
        %v1358 = vadd.f32 0.0, %v1357
        %v1359 = vpop.f32.mrf.mxu0
        %v1360 = vpop.f32.mrf.mxu0
        %v1361 = vpop.f32.mrf.mxu0
        %1362 = vdwg.mxu0
        %vm1363 = vcmask 130048
        %v1364 = vsel %vm1363, %v1036, -inf
        %1365 = vmax.xlane.f32.xlu0 %v1364
        %v1366 = vpop.xlane.xlu0 %1365
        %v1367 = vsel %vm1363, %v1082, -inf
        %1368 = vmax.xlane.f32.xlu0 %v1367
        %v1369 = vpop.xlane.xlu0 %1368
        %v1370 = vsel %vm1363, %v1128, -inf
        %1371 = vmax.xlane.f32.xlu0 %v1370
        %v1372 = vpop.xlane.xlu0 %1371
        %v1373 = vsel %vm1363, %v1174, -inf
        %1374 = vmax.xlane.f32.xlu0 %v1373
        %v1375 = vpop.xlane.xlu0 %1374
        %v1376 = vsel %vm1363, %v1220, -inf
        %1377 = vmax.xlane.f32.xlu0 %v1376
        %v1378 = vpop.xlane.xlu0 %1377
        %v1379 = vsel %vm1363, %v1266, -inf
        %1380 = vmax.xlane.f32.xlu0 %v1379
        %v1381 = vpop.xlane.xlu0 %1380
        %v1382 = vsel %vm1363, %v1312, -inf
        %1383 = vmax.xlane.f32.xlu0 %v1382
        %v1384 = vpop.xlane.xlu0 %1383
        %v1385 = vsel %vm1363, %v1358, -inf
        %1386 = vmax.xlane.f32.xlu0 %v1385
        %v1387 = vpop.xlane.xlu0 %1386
        %v1388 = vsub.f32 %v1036, %v1366
        %v1389 = vsub.f32 %v1082, %v1369
        %v1390 = vsub.f32 %v1128, %v1372
        %v1391 = vsub.f32 %v1174, %v1375
        %v1392 = vsub.f32 %v1220, %v1378
        %v1393 = vsub.f32 %v1266, %v1381
        %v1394 = vsub.f32 %v1312, %v1384
        %v1395 = vsub.f32 %v1358, %v1387
        %v1396 = vmul.f32 %v1388, 1.442695
        %v1397 = vpow.pop %v1396
        %v1398 = vmul.f32 %v1389, 1.442695
        %v1399 = vpow.pop %v1398
        %v1400 = vmul.f32 %v1390, 1.442695
        %v1401 = vpow.pop %v1400
        %v1402 = vmul.f32 %v1391, 1.442695
        %v1403 = vpow.pop %v1402
        %v1404 = vmul.f32 %v1392, 1.442695
        %v1405 = vpow.pop %v1404
        %v1406 = vmul.f32 %v1393, 1.442695
        %v1407 = vpow.pop %v1406
        %v1408 = vmul.f32 %v1394, 1.442695
        %v1409 = vpow.pop %v1408
        %v1410 = vmul.f32 %v1395, 1.442695
        %v1411 = vpow.pop %v1410
        %v1412 = vsel %vm1363, %v1397, 0.0
        %1413 = vadd.xlane.f32.xlu0 %v1412
        %v1414 = vpop.xlane.xlu0 %1413
        %v1415 = vsel %vm1363, %v1399, 0.0
        %1416 = vadd.xlane.f32.xlu0 %v1415
        %v1417 = vpop.xlane.xlu0 %1416
        %v1418 = vsel %vm1363, %v1401, 0.0
        %1419 = vadd.xlane.f32.xlu0 %v1418
        %v1420 = vpop.xlane.xlu0 %1419
        %v1421 = vsel %vm1363, %v1403, 0.0
        %1422 = vadd.xlane.f32.xlu0 %v1421
        %v1423 = vpop.xlane.xlu0 %1422
        %v1424 = vsel %vm1363, %v1405, 0.0
        %1425 = vadd.xlane.f32.xlu0 %v1424
        %v1426 = vpop.xlane.xlu0 %1425
        %v1427 = vsel %vm1363, %v1407, 0.0
        %1428 = vadd.xlane.f32.xlu0 %v1427
        %v1429 = vpop.xlane.xlu0 %1428
        %v1430 = vsel %vm1363, %v1409, 0.0
        %1431 = vadd.xlane.f32.xlu0 %v1430
        %v1432 = vpop.xlane.xlu0 %1431
        %v1433 = vsel %vm1363, %v1411, 0.0
        %1434 = vadd.xlane.f32.xlu0 %v1433
        %v1435 = vpop.xlane.xlu0 %1434
        %v1436 = vrcp.pop %v1414
        %v1437 = vrcp.pop %v1417
        %v1438 = vrcp.pop %v1420
        %v1439 = vrcp.pop %v1423
        %v1440 = vrcp.pop %v1426
        %v1441 = vrcp.pop %v1429
        %v1442 = vrcp.pop %v1432
        %v1443 = vrcp.pop %v1435
        %v1444 = vmul.f32 %v1397, %v1436
        %v1445 = vmul.f32 %v1399, %v1437
        %v1446 = vmul.f32 %v1401, %v1438
        %v1447 = vmul.f32 %v1403, %v1439
        %v1448 = vmul.f32 %v1405, %v1440
        %v1449 = vmul.f32 %v1407, %v1441
        %v1450 = vmul.f32 %v1409, %v1442
        %v1451 = vmul.f32 %v1411, %v1443
        %v1452 = vpack.c.bf16 %v1444, %v1444
        %v1453 = vpack.c.bf16 %v1445, %v1445
        %v1454 = vpack.c.bf16 %v1446, %v1446
        %v1455 = vpack.c.bf16 %v1447, %v1447
        %v1456 = vpack.c.bf16 %v1448, %v1448
        %v1457 = vpack.c.bf16 %v1449, %v1449
        %v1458 = vpack.c.bf16 %v1450, %v1450
        %v1459 = vpack.c.bf16 %v1451, %v1451
        %v1461 = vsel %vm1363, %v1452, 0
        %1463 = vmatprep.subr.bf16.mxu0 0
        %1464 = vmatpush1.bf16.msra.mxu0 0
        %1465 = vmatprep.subr.bf16.mxu0 0
        %1466 = vmatpush1.bf16.msra.mxu0 0
        %1467 = vmatprep.subr.bf16.mxu0 0
        %1468 = vmatpush1.bf16.msra.mxu0 0
        %1469 = vmatprep.subr.bf16.mxu0 0
        %1470 = vmatpush1.bf16.msra.mxu0 0
        %1471 = vmatprep.subr.bf16.mxu0 0
        %1472 = vmatpush1.bf16.msra.mxu0 0
        %1473 = vmatprep.subr.bf16.mxu0 0
        %1474 = vmatpush1.bf16.msra.mxu0 0
        %1475 = vmatprep.subr.bf16.mxu0 0
        %1476 = vmatpush1.bf16.msra.mxu0 0
        %1477 = vmatprep.subr.bf16.mxu0 0
        %1478 = vmatpush1.bf16.msra.mxu0 %v986
        %1479 = vmatprep.subr.bf16.mxu0 0
        %1480 = vmatpush2.bf16.msra.mxu0 0
        %1481 = vmatprep.subr.bf16.mxu0 0
        %1482 = vmatpush2.bf16.msra.mxu0 0
        %1483 = vmatprep.subr.bf16.mxu0 0
        %1484 = vmatpush2.bf16.msra.mxu0 0
        %1485 = vmatprep.subr.bf16.mxu0 0
        %1486 = vmatpush2.bf16.msra.mxu0 0
        %1487 = vmatprep.subr.bf16.mxu0 0
        %1488 = vmatpush2.bf16.msra.mxu0 0
        %1489 = vmatprep.subr.bf16.mxu0 0
        %1490 = vmatpush2.bf16.msra.mxu0 0
        %1491 = vmatprep.subr.bf16.mxu0 0
        %1492 = vmatpush2.bf16.msra.mxu0 0
        %1493 = vmatprep.subr.bf16.mxu0 0
        %1494 = vmatpush2.bf16.msra.mxu0 0
        %1495 = vmatprep.mubr.bf16.mxu0 0
        %1496 = vmatmul.mubr.bf16.gmra.mxu0 %v1461
        %v1497 = vpop.f32.mrf.mxu0
        %v1498 = vadd.f32 0.0, %v1497
        %v1499 = vpop.f32.mrf.mxu0
        %v1500 = vpop.f32.mrf.mxu0
        %v1501 = vpop.f32.mrf.mxu0
        %1502 = vdwg.mxu0
        %v1504 = vsel %vm1363, %v1453, 0
        %1506 = vmatprep.subr.bf16.mxu0 0
        %1507 = vmatpush1.bf16.msra.mxu0 0
        %1508 = vmatprep.subr.bf16.mxu0 0
        %1509 = vmatpush1.bf16.msra.mxu0 0
        %1510 = vmatprep.subr.bf16.mxu0 0
        %1511 = vmatpush1.bf16.msra.mxu0 0
        %1512 = vmatprep.subr.bf16.mxu0 0
        %1513 = vmatpush1.bf16.msra.mxu0 0
        %1514 = vmatprep.subr.bf16.mxu0 0
        %1515 = vmatpush1.bf16.msra.mxu0 0
        %1516 = vmatprep.subr.bf16.mxu0 0
        %1517 = vmatpush1.bf16.msra.mxu0 0
        %1518 = vmatprep.subr.bf16.mxu0 0
        %1519 = vmatpush1.bf16.msra.mxu0 0
        %1520 = vmatprep.subr.bf16.mxu0 0
        %1521 = vmatpush1.bf16.msra.mxu0 %v987
        %1522 = vmatprep.subr.bf16.mxu0 0
        %1523 = vmatpush2.bf16.msra.mxu0 0
        %1524 = vmatprep.subr.bf16.mxu0 0
        %1525 = vmatpush2.bf16.msra.mxu0 0
        %1526 = vmatprep.subr.bf16.mxu0 0
        %1527 = vmatpush2.bf16.msra.mxu0 0
        %1528 = vmatprep.subr.bf16.mxu0 0
        %1529 = vmatpush2.bf16.msra.mxu0 0
        %1530 = vmatprep.subr.bf16.mxu0 0
        %1531 = vmatpush2.bf16.msra.mxu0 0
        %1532 = vmatprep.subr.bf16.mxu0 0
        %1533 = vmatpush2.bf16.msra.mxu0 0
        %1534 = vmatprep.subr.bf16.mxu0 0
        %1535 = vmatpush2.bf16.msra.mxu0 0
        %1536 = vmatprep.subr.bf16.mxu0 0
        %1537 = vmatpush2.bf16.msra.mxu0 0
        %1538 = vmatprep.mubr.bf16.mxu0 0
        %1539 = vmatmul.mubr.bf16.gmra.mxu0 %v1504
        %v1540 = vpop.f32.mrf.mxu0
        %v1541 = vadd.f32 0.0, %v1540
        %v1542 = vpop.f32.mrf.mxu0
        %v1543 = vpop.f32.mrf.mxu0
        %v1544 = vpop.f32.mrf.mxu0
        %1545 = vdwg.mxu0
        %v1547 = vsel %vm1363, %v1454, 0
        %1549 = vmatprep.subr.bf16.mxu0 0
        %1550 = vmatpush1.bf16.msra.mxu0 0
        %1551 = vmatprep.subr.bf16.mxu0 0
        %1552 = vmatpush1.bf16.msra.mxu0 0
        %1553 = vmatprep.subr.bf16.mxu0 0
        %1554 = vmatpush1.bf16.msra.mxu0 0
        %1555 = vmatprep.subr.bf16.mxu0 0
        %1556 = vmatpush1.bf16.msra.mxu0 0
        %1557 = vmatprep.subr.bf16.mxu0 0
        %1558 = vmatpush1.bf16.msra.mxu0 0
        %1559 = vmatprep.subr.bf16.mxu0 0
        %1560 = vmatpush1.bf16.msra.mxu0 0
        %1561 = vmatprep.subr.bf16.mxu0 0
        %1562 = vmatpush1.bf16.msra.mxu0 0
        %1563 = vmatprep.subr.bf16.mxu0 0
        %1564 = vmatpush1.bf16.msra.mxu0 %v988
        %1565 = vmatprep.subr.bf16.mxu0 0
        %1566 = vmatpush2.bf16.msra.mxu0 0
        %1567 = vmatprep.subr.bf16.mxu0 0
        %1568 = vmatpush2.bf16.msra.mxu0 0
        %1569 = vmatprep.subr.bf16.mxu0 0
        %1570 = vmatpush2.bf16.msra.mxu0 0
        %1571 = vmatprep.subr.bf16.mxu0 0
        %1572 = vmatpush2.bf16.msra.mxu0 0
        %1573 = vmatprep.subr.bf16.mxu0 0
        %1574 = vmatpush2.bf16.msra.mxu0 0
        %1575 = vmatprep.subr.bf16.mxu0 0
        %1576 = vmatpush2.bf16.msra.mxu0 0
        %1577 = vmatprep.subr.bf16.mxu0 0
        %1578 = vmatpush2.bf16.msra.mxu0 0
        %1579 = vmatprep.subr.bf16.mxu0 0
        %1580 = vmatpush2.bf16.msra.mxu0 0
        %1581 = vmatprep.mubr.bf16.mxu0 0
        %1582 = vmatmul.mubr.bf16.gmra.mxu0 %v1547
        %v1583 = vpop.f32.mrf.mxu0
        %v1584 = vadd.f32 0.0, %v1583
        %v1585 = vpop.f32.mrf.mxu0
        %v1586 = vpop.f32.mrf.mxu0
        %v1587 = vpop.f32.mrf.mxu0
        %1588 = vdwg.mxu0
        %v1590 = vsel %vm1363, %v1455, 0
        %1592 = vmatprep.subr.bf16.mxu0 0
        %1593 = vmatpush1.bf16.msra.mxu0 0
        %1594 = vmatprep.subr.bf16.mxu0 0
        %1595 = vmatpush1.bf16.msra.mxu0 0
        %1596 = vmatprep.subr.bf16.mxu0 0
        %1597 = vmatpush1.bf16.msra.mxu0 0
        %1598 = vmatprep.subr.bf16.mxu0 0
        %1599 = vmatpush1.bf16.msra.mxu0 0
        %1600 = vmatprep.subr.bf16.mxu0 0
        %1601 = vmatpush1.bf16.msra.mxu0 0
        %1602 = vmatprep.subr.bf16.mxu0 0
        %1603 = vmatpush1.bf16.msra.mxu0 0
        %1604 = vmatprep.subr.bf16.mxu0 0
        %1605 = vmatpush1.bf16.msra.mxu0 0
        %1606 = vmatprep.subr.bf16.mxu0 0
        %1607 = vmatpush1.bf16.msra.mxu0 %v989
        %1608 = vmatprep.subr.bf16.mxu0 0
        %1609 = vmatpush2.bf16.msra.mxu0 0
        %1610 = vmatprep.subr.bf16.mxu0 0
        %1611 = vmatpush2.bf16.msra.mxu0 0
        %1612 = vmatprep.subr.bf16.mxu0 0
        %1613 = vmatpush2.bf16.msra.mxu0 0
        %1614 = vmatprep.subr.bf16.mxu0 0
        %1615 = vmatpush2.bf16.msra.mxu0 0
        %1616 = vmatprep.subr.bf16.mxu0 0
        %1617 = vmatpush2.bf16.msra.mxu0 0
        %1618 = vmatprep.subr.bf16.mxu0 0
        %1619 = vmatpush2.bf16.msra.mxu0 0
        %1620 = vmatprep.subr.bf16.mxu0 0
        %1621 = vmatpush2.bf16.msra.mxu0 0
        %1622 = vmatprep.subr.bf16.mxu0 0
        %1623 = vmatpush2.bf16.msra.mxu0 0
        %1624 = vmatprep.mubr.bf16.mxu0 0
        %1625 = vmatmul.mubr.bf16.gmra.mxu0 %v1590
        %v1626 = vpop.f32.mrf.mxu0
        %v1627 = vadd.f32 0.0, %v1626
        %v1628 = vpop.f32.mrf.mxu0
        %v1629 = vpop.f32.mrf.mxu0
        %v1630 = vpop.f32.mrf.mxu0
        %1631 = vdwg.mxu0
        %v1633 = vsel %vm1363, %v1456, 0
        %1635 = vmatprep.subr.bf16.mxu0 0
        %1636 = vmatpush1.bf16.msra.mxu0 0
        %1637 = vmatprep.subr.bf16.mxu0 0
        %1638 = vmatpush1.bf16.msra.mxu0 0
        %1639 = vmatprep.subr.bf16.mxu0 0
        %1640 = vmatpush1.bf16.msra.mxu0 0
        %1641 = vmatprep.subr.bf16.mxu0 0
        %1642 = vmatpush1.bf16.msra.mxu0 0
        %1643 = vmatprep.subr.bf16.mxu0 0
        %1644 = vmatpush1.bf16.msra.mxu0 0
        %1645 = vmatprep.subr.bf16.mxu0 0
        %1646 = vmatpush1.bf16.msra.mxu0 0
        %1647 = vmatprep.subr.bf16.mxu0 0
        %1648 = vmatpush1.bf16.msra.mxu0 0
        %1649 = vmatprep.subr.bf16.mxu0 0
        %1650 = vmatpush1.bf16.msra.mxu0 %v990
        %1651 = vmatprep.subr.bf16.mxu0 0
        %1652 = vmatpush2.bf16.msra.mxu0 0
        %1653 = vmatprep.subr.bf16.mxu0 0
        %1654 = vmatpush2.bf16.msra.mxu0 0
        %1655 = vmatprep.subr.bf16.mxu0 0
        %1656 = vmatpush2.bf16.msra.mxu0 0
        %1657 = vmatprep.subr.bf16.mxu0 0
        %1658 = vmatpush2.bf16.msra.mxu0 0
        %1659 = vmatprep.subr.bf16.mxu0 0
        %1660 = vmatpush2.bf16.msra.mxu0 0
        %1661 = vmatprep.subr.bf16.mxu0 0
        %1662 = vmatpush2.bf16.msra.mxu0 0
        %1663 = vmatprep.subr.bf16.mxu0 0
        %1664 = vmatpush2.bf16.msra.mxu0 0
        %1665 = vmatprep.subr.bf16.mxu0 0
        %1666 = vmatpush2.bf16.msra.mxu0 0
        %1667 = vmatprep.mubr.bf16.mxu0 0
        %1668 = vmatmul.mubr.bf16.gmra.mxu0 %v1633
        %v1669 = vpop.f32.mrf.mxu0
        %v1670 = vadd.f32 0.0, %v1669
        %v1671 = vpop.f32.mrf.mxu0
        %v1672 = vpop.f32.mrf.mxu0
        %v1673 = vpop.f32.mrf.mxu0
        %1674 = vdwg.mxu0
        %v1676 = vsel %vm1363, %v1457, 0
        %1678 = vmatprep.subr.bf16.mxu0 0
        %1679 = vmatpush1.bf16.msra.mxu0 0
        %1680 = vmatprep.subr.bf16.mxu0 0
        %1681 = vmatpush1.bf16.msra.mxu0 0
        %1682 = vmatprep.subr.bf16.mxu0 0
        %1683 = vmatpush1.bf16.msra.mxu0 0
        %1684 = vmatprep.subr.bf16.mxu0 0
        %1685 = vmatpush1.bf16.msra.mxu0 0
        %1686 = vmatprep.subr.bf16.mxu0 0
        %1687 = vmatpush1.bf16.msra.mxu0 0
        %1688 = vmatprep.subr.bf16.mxu0 0
        %1689 = vmatpush1.bf16.msra.mxu0 0
        %1690 = vmatprep.subr.bf16.mxu0 0
        %1691 = vmatpush1.bf16.msra.mxu0 0
        %1692 = vmatprep.subr.bf16.mxu0 0
        %1693 = vmatpush1.bf16.msra.mxu0 %v991
        %1694 = vmatprep.subr.bf16.mxu0 0
        %1695 = vmatpush2.bf16.msra.mxu0 0
        %1696 = vmatprep.subr.bf16.mxu0 0
        %1697 = vmatpush2.bf16.msra.mxu0 0
        %1698 = vmatprep.subr.bf16.mxu0 0
        %1699 = vmatpush2.bf16.msra.mxu0 0
        %1700 = vmatprep.subr.bf16.mxu0 0
        %1701 = vmatpush2.bf16.msra.mxu0 0
        %1702 = vmatprep.subr.bf16.mxu0 0
        %1703 = vmatpush2.bf16.msra.mxu0 0
        %1704 = vmatprep.subr.bf16.mxu0 0
        %1705 = vmatpush2.bf16.msra.mxu0 0
        %1706 = vmatprep.subr.bf16.mxu0 0
        %1707 = vmatpush2.bf16.msra.mxu0 0
        %1708 = vmatprep.subr.bf16.mxu0 0
        %1709 = vmatpush2.bf16.msra.mxu0 0
        %1710 = vmatprep.mubr.bf16.mxu0 0
        %1711 = vmatmul.mubr.bf16.gmra.mxu0 %v1676
        %v1712 = vpop.f32.mrf.mxu0
        %v1713 = vadd.f32 0.0, %v1712
        %v1714 = vpop.f32.mrf.mxu0
        %v1715 = vpop.f32.mrf.mxu0
        %v1716 = vpop.f32.mrf.mxu0
        %1717 = vdwg.mxu0
        %v1719 = vsel %vm1363, %v1458, 0
        %1721 = vmatprep.subr.bf16.mxu0 0
        %1722 = vmatpush1.bf16.msra.mxu0 0
        %1723 = vmatprep.subr.bf16.mxu0 0
        %1724 = vmatpush1.bf16.msra.mxu0 0
        %1725 = vmatprep.subr.bf16.mxu0 0
        %1726 = vmatpush1.bf16.msra.mxu0 0
        %1727 = vmatprep.subr.bf16.mxu0 0
        %1728 = vmatpush1.bf16.msra.mxu0 0
        %1729 = vmatprep.subr.bf16.mxu0 0
        %1730 = vmatpush1.bf16.msra.mxu0 0
        %1731 = vmatprep.subr.bf16.mxu0 0
        %1732 = vmatpush1.bf16.msra.mxu0 0
        %1733 = vmatprep.subr.bf16.mxu0 0
        %1734 = vmatpush1.bf16.msra.mxu0 0
        %1735 = vmatprep.subr.bf16.mxu0 0
        %1736 = vmatpush1.bf16.msra.mxu0 %v992
        %1737 = vmatprep.subr.bf16.mxu0 0
        %1738 = vmatpush2.bf16.msra.mxu0 0
        %1739 = vmatprep.subr.bf16.mxu0 0
        %1740 = vmatpush2.bf16.msra.mxu0 0
        %1741 = vmatprep.subr.bf16.mxu0 0
        %1742 = vmatpush2.bf16.msra.mxu0 0
        %1743 = vmatprep.subr.bf16.mxu0 0
        %1744 = vmatpush2.bf16.msra.mxu0 0
        %1745 = vmatprep.subr.bf16.mxu0 0
        %1746 = vmatpush2.bf16.msra.mxu0 0
        %1747 = vmatprep.subr.bf16.mxu0 0
        %1748 = vmatpush2.bf16.msra.mxu0 0
        %1749 = vmatprep.subr.bf16.mxu0 0
        %1750 = vmatpush2.bf16.msra.mxu0 0
        %1751 = vmatprep.subr.bf16.mxu0 0
        %1752 = vmatpush2.bf16.msra.mxu0 0
        %1753 = vmatprep.mubr.bf16.mxu0 0
        %1754 = vmatmul.mubr.bf16.gmra.mxu0 %v1719
        %v1755 = vpop.f32.mrf.mxu0
        %v1756 = vadd.f32 0.0, %v1755
        %v1757 = vpop.f32.mrf.mxu0
        %v1758 = vpop.f32.mrf.mxu0
        %v1759 = vpop.f32.mrf.mxu0
        %1760 = vdwg.mxu0
        %v1762 = vsel %vm1363, %v1459, 0
        %1764 = vmatprep.subr.bf16.mxu0 0
        %1765 = vmatpush1.bf16.msra.mxu0 0
        %1766 = vmatprep.subr.bf16.mxu0 0
        %1767 = vmatpush1.bf16.msra.mxu0 0
        %1768 = vmatprep.subr.bf16.mxu0 0
        %1769 = vmatpush1.bf16.msra.mxu0 0
        %1770 = vmatprep.subr.bf16.mxu0 0
        %1771 = vmatpush1.bf16.msra.mxu0 0
        %1772 = vmatprep.subr.bf16.mxu0 0
        %1773 = vmatpush1.bf16.msra.mxu0 0
        %1774 = vmatprep.subr.bf16.mxu0 0
        %1775 = vmatpush1.bf16.msra.mxu0 0
        %1776 = vmatprep.subr.bf16.mxu0 0
        %1777 = vmatpush1.bf16.msra.mxu0 0
        %1778 = vmatprep.subr.bf16.mxu0 0
        %1779 = vmatpush1.bf16.msra.mxu0 %v993
        %1780 = vmatprep.subr.bf16.mxu0 0
        %1781 = vmatpush2.bf16.msra.mxu0 0
        %1782 = vmatprep.subr.bf16.mxu0 0
        %1783 = vmatpush2.bf16.msra.mxu0 0
        %1784 = vmatprep.subr.bf16.mxu0 0
        %1785 = vmatpush2.bf16.msra.mxu0 0
        %1786 = vmatprep.subr.bf16.mxu0 0
        %1787 = vmatpush2.bf16.msra.mxu0 0
        %1788 = vmatprep.subr.bf16.mxu0 0
        %1789 = vmatpush2.bf16.msra.mxu0 0
        %1790 = vmatprep.subr.bf16.mxu0 0
        %1791 = vmatpush2.bf16.msra.mxu0 0
        %1792 = vmatprep.subr.bf16.mxu0 0
        %1793 = vmatpush2.bf16.msra.mxu0 0
        %1794 = vmatprep.subr.bf16.mxu0 0
        %1795 = vmatpush2.bf16.msra.mxu0 0
        %1796 = vmatprep.mubr.bf16.mxu0 0
        %1797 = vmatmul.mubr.bf16.gmra.mxu0 %v1762
        %v1798 = vpop.f32.mrf.mxu0
        %v1799 = vadd.f32 0.0, %v1798
        %v1800 = vpop.f32.mrf.mxu0
        %v1801 = vpop.f32.mrf.mxu0
        %v1802 = vpop.f32.mrf.mxu0
        %1803 = vdwg.mxu0
        %1804 = vst.msk [vmem:[%s409] sm:$0xff] %vm994, %v1498
        %1805 = vst.msk [vmem:[%s409 + $0x8] sm:$0xff] %vm994, %v1541
        %1806 = vst.msk [vmem:[%s409 + $0x10] sm:$0xff] %vm994, %v1584
        %1807 = vst.msk [vmem:[%s409 + $0x18] sm:$0xff] %vm994, %v1627
        %1808 = vst.msk [vmem:[%s409 + $0x20] sm:$0xff] %vm994, %v1670
        %1809 = vst.msk [vmem:[%s409 + $0x28] sm:$0xff] %vm994, %v1713
        %1810 = vst.msk [vmem:[%s409 + $0x30] sm:$0xff] %vm994, %v1756
        %1811 = vst.msk [vmem:[%s409 + $0x38] sm:$0xff] %vm994, %v1799
        %s1812 = sand.u32 %s252, 1
        %s1813 = scalar_lea.sflag [#allocation3], %s1812
        %s1814 = sand.u32 %s252, 1
        %s1815 = smul.addr %s1814, 64
        %s1816 = scalar_lea.vmem [#allocation2], %s1815
        // Predicated region
        $region53: #{tpu_custom_call.1} parent=51 // pred_check
          %p1817 = pneg %p262
        $region54: #{tpu_custom_call.1} parent=51 // pred_check_branch
          %1819 = sbr.rel (%p1817) target = $region56
        $region55: #{tpu_custom_call.1} parent=51 // pred_region
          %s1820 = smul.u32 8, %s26
          %s1822 = ssub.s32 1024, 1024
          %1823 = vsyncadd %s1813, %s1822
          %s1824 = smul.addr %s27, 8
          %s1825 = sadd.s32 %s1820, %s1824
          %s1826 = smul.addr %s1825, 128
          %s1827 = scalar_lea.hbm %s8, %s1826
          %s1828 = sshll.u32 %s1816, 4
          %s1829 = int_to_ptr.vmem [resolvable:$true] %s1828
          %1834 = dma.vmem_to_hbm [thread:$0]  %s1829, 1024, %s1827, %s1813, 128, 128, 8
        $region56: #{tpu_custom_call.1} parent=51 // pred_fallthru
          _
      $region52: #{tpu_custom_call.1} parent=5 // pred_fallthru
        _
      %p1835 = scmp.le.s32.totalorder 2, %s17
      // Predicated region
      $region57: #{tpu_custom_call.1} parent=5 // pred_check
        %p1836 = pneg %p1835
      $region58: #{tpu_custom_call.1} parent=5 // pred_check_branch
        %1838 = sbr.rel (%p1836) target = $region60
      $region59: #{tpu_custom_call.1} parent=5 // pred_region
        %s1839 = ssub.s32 %s17, 2
        // Predicated region
        $region61: #{tpu_custom_call.1} parent=59 // pred_check
          %p1840 = pneg %p268
        $region62: #{tpu_custom_call.1} parent=59 // pred_check_branch
          %1842 = sbr.rel (%p1840) target = $region64
        $region63: #{tpu_custom_call.1} parent=59 // pred_region
          %s1843 = sand.u32 %s253, 1
          %s1844 = scalar_lea.sflag [#allocation3], %s1843
          %s1845 = sand.u32 %s253, 1
          %s1846 = smul.addr %s1845, 64
          %s1847 = scalar_lea.vmem [#allocation2], %s1846
          %1848 = dma.done %s1844, 1024
        $region64: #{tpu_custom_call.1} parent=59 // pred_fallthru
          _
      $region60: #{tpu_custom_call.1} parent=5 // pred_fallthru
        _
    $region6: #{tpu_custom_call.1} parent=1 // loop_footer
      %s21 = sadd.s32 1, %s17
    $region7: #{tpu_custom_call.1} parent=1 // loop_footer_branch
      %16 = sbr.rel target = $region3
    $region8: #{tpu_custom_call.1} parent=1 // loop_exit
      _
    %1849 = vsyncpa [#allocation3], 1
    %s1850 = scalar_lea.sflag [#allocation3], 1
    %1851 = vsyncpa %s1850, 1

</llo_original>
